<compile_context>
chip_gen: v7x
topology: tpu7x:2x2x1
jax: 0.10.0
libtpu: 0.0.40
codegen_flags: <defaults>
</compile_context>

<pallas_src>
import jax
import jax.numpy as jnp
import numpy as np
from jax import lax
from jax.experimental import pallas as pl
from jax.experimental.pallas import tpu as pltpu


def gcn_critic_kernel(s_ref, a_ref,
                      w1s_ref, w1a_ref, b1_ref,
                      w2_ref, b2_ref,
                      wvT_ref, bvT_ref,
                      q_ref):
    """One grid step = TILE_B batch elements.

    s_ref   : VMEM [TILE_B, N*state_dim]   joint states (caller layout)
    a_ref   : VMEM [TILE_B, N*action_dim]  joint actions (caller layout)
    w1s_ref : VMEM [N*state_dim,  N*H]     adjacency-fused layer-1 (state part)
    w1a_ref : VMEM [N*action_dim, N*H]     adjacency-fused layer-1 (action part)
    w2_ref  : VMEM [N*H, N*H]              adjacency-fused layer-2
    wvT_ref : VMEM [2, N*H]                both value heads, pre-transposed
    bvT_ref : VMEM [2, 1]                  N * [bv1; bv2]
    q_ref   : VMEM [2, TILE_B]             lane-dense output (heads x batch)
    """
    cdt = w2_ref.dtype  # compute dtype for MXU operands (bf16 or f32)

    # ---- GCN layer 1: one fused matmul per input stream, f32 accumulate ----
    h1 = jnp.dot(s_ref[...].astype(cdt), w1s_ref[...],
                 preferred_element_type=jnp.float32)
    h1 = h1 + jnp.dot(a_ref[...].astype(cdt), w1a_ref[...],
                      preferred_element_type=jnp.float32)
    h1 = jnp.maximum(h1 + b1_ref[...], 0.0)            # [TILE_B, N*H] f32

    # ---- GCN layer 2: single [TILE_B, N*H] @ [N*H, N*H] matmul ----
    h2 = jnp.dot(h1.astype(cdt), w2_ref[...],
                 preferred_element_type=jnp.float32)
    h2 = jnp.maximum(h2 + b2_ref[...], 0.0)             # [TILE_B, N*H] f32

    # ---- value heads: contract on hidden so the result is [2, TILE_B] ----
    q = lax.dot_general(wvT_ref[...], h2.astype(cdt),
                        dimension_numbers=(((1,), (1,)), ((), ())),
                        preferred_element_type=jnp.float32)   # [2, TILE_B]
    q_ref[...] = q + bvT_ref[...]


def build_fused_params(params, n_agents, state_dim, action_dim,
                       compute_dtype=jnp.bfloat16):
    """Fold the (normalized) adjacency and the self/neighbor split into dense
    weights.  Hoist this out of the training/eval loop — it only depends on
    the module parameters, not on the batch."""
    hidden = params["w1s"].shape[1]
    A = (params["adj"] / float(n_agents)).astype(jnp.float32)       # [N, N]
    eye = jnp.eye(n_agents, dtype=jnp.float32)
    rowsum = A.sum(axis=1)                                           # [N]

    def big(ws, wn):
        # ws, wn: [F, H] -> [N*F, N*H];  block (j, i) = delta_ij*ws + A[i,j]*wn
        f = ws.shape[0]
        blocks = (eye[:, :, None, None] * ws[None, None, :, :]
                  + A.T[:, :, None, None] * wn[None, None, :, :])    # [j,i,F,H]
        return blocks.transpose(0, 2, 1, 3).reshape(n_agents * f, n_agents * hidden)

    def big_bias(bs, bn):
        # bs, bn: [1, H] -> [1, N*H];  per-agent bias = bs + rowsum_i * bn
        return (bs + rowsum[:, None] * bn).reshape(1, n_agents * hidden)

    sd = state_dim
    w1s_big = big(params["w1s"][:sd], params["w1n"][:sd])            # [N*sd, N*H]
    w1a_big = big(params["w1s"][sd:], params["w1n"][sd:])            # [N*ad, N*H]
    b1_big = big_bias(params["b1s"], params["b1n"])                  # [1, N*H]
    w2_big = big(params["w2s"], params["w2n"])                       # [N*H, N*H]
    b2_big = big_bias(params["b2s"], params["b2n"])                  # [1, N*H]

    wv = jnp.concatenate([params["wv1"], params["wv2"]], axis=1)     # [H, 2]
    wvT_big = jnp.tile(wv.T, (1, n_agents))                          # [2, N*H]
    bv = jnp.concatenate([params["bv1"], params["bv2"]], axis=1)     # [1, 2]
    bvT = (float(n_agents) * bv).T                                   # [2, 1]

    return {
        "w1s_big": w1s_big.astype(compute_dtype),
        "w1a_big": w1a_big.astype(compute_dtype),
        "b1_big": b1_big.astype(jnp.float32),
        "w2_big": w2_big.astype(compute_dtype),
        "b2_big": b2_big.astype(jnp.float32),
        "wvT_big": wvT_big.astype(compute_dtype),
        "bvT": bvT.astype(jnp.float32),
    }


def gcn_critic_forward(states, actions, fused, *, tile_b=512):
    """states: [B, N*state_dim], actions: [B, N*action_dim] -> (q1, q2), each [B, 1].

    `fused` comes from build_fused_params().  tile_b is the batch tile
    (multiple of 128); on v7x choose it so the batch splits into >= 2 blocks
    so both TensorCores are used.
    """
    B = states.shape[0]
    nsd = states.shape[1]
    nad = actions.shape[1]
    nh = fused["w2_big"].shape[0]

    # Batch tiling (tile must stay a multiple of 128 for the lane-dense output).
    b_round = max(128, ((B + 127) // 128) * 128)
    tile_b = min(tile_b, b_round)
    num_blocks = pl.cdiv(b_round, tile_b)
    b_pad = num_blocks * tile_b
    if b_pad != B:
        states = jnp.pad(states, ((0, b_pad - B), (0, 0)))
        actions = jnp.pad(actions, ((0, b_pad - B), (0, 0)))

    def rep(shape):
        return pl.BlockSpec(shape, lambda t: (0,) * len(shape))

    in_specs = [
        pl.BlockSpec((tile_b, nsd), lambda t: (t, 0)),   # states block
        pl.BlockSpec((tile_b, nad), lambda t: (t, 0)),   # actions block
        rep((nsd, nh)),                                  # w1 (state rows)
        rep((nad, nh)),                                  # w1 (action rows)
        rep((1, nh)),                                    # b1
        rep((nh, nh)),                                   # w2
        rep((1, nh)),                                    # b2
        rep((2, nh)),                                    # value heads (transposed)
        rep((2, 1)),                                     # N * bv
    ]
    out_spec = pl.BlockSpec((2, tile_b), lambda t: (0, t))

    q = pl.pallas_call(
        gcn_critic_kernel,
        out_shape=jax.ShapeDtypeStruct((2, b_pad), jnp.float32),
        grid=(num_blocks,),
        in_specs=in_specs,
        out_specs=out_spec,
        compiler_params=pltpu.CompilerParams(dimension_semantics=("parallel",)),
    )(states, actions,
      fused["w1s_big"], fused["w1a_big"], fused["b1_big"],
      fused["w2_big"], fused["b2_big"],
      fused["wvT_big"], fused["bvT"])

    q1 = q[0, :B].reshape(B, 1)
    q2 = q[1, :B].reshape(B, 1)
    return q1, q2


def init_params(key, state_dim, action_dim, n_agents, hidden_dim):
    """Deterministic synthetic init matching the module's shapes.
    Weights ~ N(0, 0.1) (as in the module), biases ~ U(-1/sqrt(fan_in), 1/sqrt(fan_in)).
    Weights stored pre-transposed as [in, out]."""
    F_dim = state_dim + action_dim
    keys = jax.random.split(key, 12)

    def w(k, in_f, out_f):
        return (0.1 * jax.random.normal(k, (out_f, in_f), jnp.float32)).T  # -> [in, out]

    def b(k, in_f, out_f):
        bound = 1.0 / np.sqrt(in_f)
        return jax.random.uniform(k, (1, out_f), jnp.float32, -bound, bound)

    adj = jnp.ones((n_agents, n_agents), jnp.float32) - jnp.eye(n_agents, dtype=jnp.float32)
    return {
        "adj": adj,
        "w1s": w(keys[0], F_dim, hidden_dim), "b1s": b(keys[1], F_dim, hidden_dim),
        "w1n": w(keys[2], F_dim, hidden_dim), "b1n": b(keys[3], F_dim, hidden_dim),
        "w2s": w(keys[4], hidden_dim, hidden_dim), "b2s": b(keys[5], hidden_dim, hidden_dim),
        "w2n": w(keys[6], hidden_dim, hidden_dim), "b2n": b(keys[7], hidden_dim, hidden_dim),
        "wv1": w(keys[8], hidden_dim, 1), "bv1": b(keys[9], hidden_dim, 1),
        "wv2": w(keys[10], hidden_dim, 1), "bv2": b(keys[11], hidden_dim, 1),
    }


def gcn_critic_reference(states, actions, params, n_agents):
    """Pure-JAX reference mirroring the PyTorch forward exactly."""
    B = states.shape[0]
    s = states.reshape(B, n_agents, -1)
    a = actions.reshape(B, n_agents, -1)
    x = jnp.concatenate([s, a], axis=2)
    norm_adj = params["adj"] / n_agents

    def gcn(x, ws, bs, wn, bn):
        self_loop = x @ ws + bs
        neigh = x @ wn + bn
        agg = jnp.einsum("ij,bjf->bif", norm_adj, neigh)
        return jax.nn.relu(self_loop + agg)

    h = gcn(x, params["w1s"], params["b1s"], params["w1n"], params["b1n"])
    h = gcn(h, params["w2s"], params["b2s"], params["w2n"], params["b2n"])
    qk1 = h @ params["wv1"] + params["bv1"]
    qk2 = h @ params["wv2"] + params["bv2"]
    return qk1.sum(axis=1), qk2.sum(axis=1)


if __name__ == "__main__":
    n_agents, state_dim, action_dim, hidden_dim = 4, 6, 2, 128

    key = jax.random.PRNGKey(0)
    kp, kd = jax.random.split(key, 2)
    params = init_params(kp, state_dim, action_dim, n_agents, hidden_dim)

    # Parameter fusion is hoisted out of the forward pass (done once).
    fused_f32 = build_fused_params(params, n_agents, state_dim, action_dim,
                                   compute_dtype=jnp.float32)
    fused_bf16 = build_fused_params(params, n_agents, state_dim, action_dim,
                                    compute_dtype=jnp.bfloat16)

    def make_inputs(batch):
        ks, ka = jax.random.split(jax.random.fold_in(kd, batch), 2)
        states = jax.random.normal(ks, (batch, n_agents * state_dim), jnp.float32)
        actions = jax.random.normal(ka, (batch, n_agents * action_dim), jnp.float32)
        return states, actions

    # 1) f32 compute: exact vs. reference on a single padded block.
    states, actions = make_inputs(2)
    q1, q2 = gcn_critic_forward(states, actions, fused_f32)
    jax.block_until_ready((q1, q2))
    q1_ref, q2_ref = gcn_critic_reference(states, actions, params, n_agents)
    np.testing.assert_allclose(np.asarray(q1), np.asarray(q1_ref), rtol=1e-3, atol=1e-3)
    np.testing.assert_allclose(np.asarray(q2), np.asarray(q2_ref), rtol=1e-3, atol=1e-3)
    assert q1.shape == (2, 1) and q2.shape == (2, 1)

    # 2) bf16 compute (default fast path): single block and multi-block grid.
    for batch in (2, 1100):
        states, actions = make_inputs(batch)
        q1, q2 = gcn_critic_forward(states, actions, fused_bf16)
        jax.block_until_ready((q1, q2))
        q1_ref, q2_ref = gcn_critic_reference(states, actions, params, n_agents)
        np.testing.assert_allclose(np.asarray(q1), np.asarray(q1_ref), rtol=5e-2, atol=5e-2)
        np.testing.assert_allclose(np.asarray(q2), np.asarray(q2_ref), rtol=5e-2, atol=5e-2)
        assert q1.shape == (batch, 1) and q2.shape == (batch, 1)

    print("KERNEL_OK")
</pallas_src>

<mosaic_0001>
module attributes {stable_mosaic.version = 11 : i64} {
  func.func @gcn_critic_kernel(%arg0: i32, %arg1: memref<128x24xf32, #tpu.memory_space<vmem>>, %arg2: memref<128x8xf32, #tpu.memory_space<vmem>>, %arg3: memref<24x512xf32, #tpu.memory_space<vmem>>, %arg4: memref<8x512xf32, #tpu.memory_space<vmem>>, %arg5: memref<1x512xf32, #tpu.memory_space<vmem>>, %arg6: memref<512x512xf32, #tpu.memory_space<vmem>>, %arg7: memref<1x512xf32, #tpu.memory_space<vmem>>, %arg8: memref<2x512xf32, #tpu.memory_space<vmem>>, %arg9: memref<2x1xf32, #tpu.memory_space<vmem>>, %arg10: memref<2x128xf32, #tpu.memory_space<vmem>>) attributes {dimension_semantics = [#tpu.dimension_semantics<parallel>], iteration_bounds = array<i64: 1>, scalar_prefetch = 0 : i64, scratch_operands = 0 : i64, tpu.core_type = #tpu.core_type<tc>, window_params = [{transform_indices = @transform_0, window_bounds = array<i64: 128, 24>}, {transform_indices = @transform_1, window_bounds = array<i64: 128, 8>}, {pipeline_mode = #tpu.pipeline_mode<synchronous>, transform_indices = @transform_2, window_bounds = array<i64: 24, 512>}, {pipeline_mode = #tpu.pipeline_mode<synchronous>, transform_indices = @transform_3, window_bounds = array<i64: 8, 512>}, {pipeline_mode = #tpu.pipeline_mode<synchronous>, transform_indices = @transform_4, window_bounds = array<i64: 1, 512>}, {pipeline_mode = #tpu.pipeline_mode<synchronous>, transform_indices = @transform_5, window_bounds = array<i64: 512, 512>}, {pipeline_mode = #tpu.pipeline_mode<synchronous>, transform_indices = @transform_6, window_bounds = array<i64: 1, 512>}, {pipeline_mode = #tpu.pipeline_mode<synchronous>, transform_indices = @transform_7, window_bounds = array<i64: 2, 512>}, {pipeline_mode = #tpu.pipeline_mode<synchronous>, transform_indices = @transform_8, window_bounds = array<i64: 2, 1>}, {transform_indices = @transform_9, window_bounds = array<i64: 2, 128>}]} {
    %c0 = arith.constant 0 : index
    %c0_0 = arith.constant 0 : index
    %0 = vector.load %arg1[%c0, %c0_0] : memref<128x24xf32, #tpu.memory_space<vmem>>, vector<128x24xf32>
    %c0_1 = arith.constant 0 : index
    %c0_2 = arith.constant 0 : index
    %1 = vector.load %arg3[%c0_1, %c0_2] : memref<24x512xf32, #tpu.memory_space<vmem>>, vector<24x512xf32>
    %cst = arith.constant dense<0.000000e+00> : vector<128x512xf32>
    %2 = tpu.matmul %0, %1, %cst {dimension_numbers = #tpu.dot_dimension_numbers<[1], [0], [0], [1], [0, 0, 1, 1], [], []>} : vector<128x24xf32>, vector<24x512xf32>, vector<128x512xf32> -> vector<128x512xf32>
    %c0_3 = arith.constant 0 : index
    %c0_4 = arith.constant 0 : index
    %3 = vector.load %arg2[%c0_3, %c0_4] : memref<128x8xf32, #tpu.memory_space<vmem>>, vector<128x8xf32>
    %c0_5 = arith.constant 0 : index
    %c0_6 = arith.constant 0 : index
    %4 = vector.load %arg4[%c0_5, %c0_6] : memref<8x512xf32, #tpu.memory_space<vmem>>, vector<8x512xf32>
    %cst_7 = arith.constant dense<0.000000e+00> : vector<128x512xf32>
    %5 = tpu.matmul %3, %4, %cst_7 {dimension_numbers = #tpu.dot_dimension_numbers<[1], [0], [0], [1], [0, 0, 1, 1], [], []>} : vector<128x8xf32>, vector<8x512xf32>, vector<128x512xf32> -> vector<128x512xf32>
    %6 = arith.addf %2, %5 : vector<128x512xf32>
    %c0_8 = arith.constant 0 : index
    %c0_9 = arith.constant 0 : index
    %7 = vector.load %arg5[%c0_8, %c0_9] : memref<1x512xf32, #tpu.memory_space<vmem>>, vector<1x512xf32>
    %8 = vector.broadcast %7 : vector<1x512xf32> to vector<128x512xf32>
    %9 = arith.addf %6, %8 : vector<128x512xf32>
    %cst_10 = arith.constant 0.000000e+00 : f32
    %10 = vector.broadcast %cst_10 : f32 to vector<128x512xf32>
    %11 = arith.maximumf %9, %10 : vector<128x512xf32>
    %c0_11 = arith.constant 0 : index
    %c0_12 = arith.constant 0 : index
    %12 = vector.load %arg6[%c0_11, %c0_12] : memref<512x512xf32, #tpu.memory_space<vmem>>, vector<512x512xf32>
    %cst_13 = arith.constant dense<0.000000e+00> : vector<128x512xf32>
    %13 = tpu.matmul %11, %12, %cst_13 {dimension_numbers = #tpu.dot_dimension_numbers<[1], [0], [0], [1], [0, 0, 1, 1], [], []>} : vector<128x512xf32>, vector<512x512xf32>, vector<128x512xf32> -> vector<128x512xf32>
    %c0_14 = arith.constant 0 : index
    %c0_15 = arith.constant 0 : index
    %14 = vector.load %arg7[%c0_14, %c0_15] : memref<1x512xf32, #tpu.memory_space<vmem>>, vector<1x512xf32>
    %15 = vector.broadcast %14 : vector<1x512xf32> to vector<128x512xf32>
    %16 = arith.addf %13, %15 : vector<128x512xf32>
    %cst_16 = arith.constant 0.000000e+00 : f32
    %17 = vector.broadcast %cst_16 : f32 to vector<128x512xf32>
    %18 = arith.maximumf %16, %17 : vector<128x512xf32>
    %c0_17 = arith.constant 0 : index
    %c0_18 = arith.constant 0 : index
    %19 = vector.load %arg8[%c0_17, %c0_18] : memref<2x512xf32, #tpu.memory_space<vmem>>, vector<2x512xf32>
    %cst_19 = arith.constant dense<0.000000e+00> : vector<2x128xf32>
    %20 = tpu.matmul %19, %18, %cst_19 {dimension_numbers = #tpu.dot_dimension_numbers<[1], [1], [0], [0], [0, 0, 1, 0], [], []>} : vector<2x512xf32>, vector<128x512xf32>, vector<2x128xf32> -> vector<2x128xf32>
    %c0_20 = arith.constant 0 : index
    %c0_21 = arith.constant 0 : index
    %21 = vector.load %arg9[%c0_20, %c0_21] : memref<2x1xf32, #tpu.memory_space<vmem>>, vector<2x1xf32>
    %22 = vector.broadcast %21 : vector<2x1xf32> to vector<2x128xf32>
    %23 = arith.addf %20, %22 : vector<2x128xf32>
    %c0_22 = arith.constant 0 : index
    %c0_23 = arith.constant 0 : index
    %24 = vector.load %arg10[%c0_22, %c0_23] : memref<2x128xf32, #tpu.memory_space<vmem>>, vector<2x128xf32>
    tpu.vector_store %arg10[%c0_22, %c0_23], %23 {strides = array<i32>} : memref<2x128xf32, #tpu.memory_space<vmem>>, vector<2x128xf32>,
    return
  }
  func.func @transform_0(%arg0: i32) -> (i32, i32) {
    %c0_i32 = arith.constant 0 : i32
    %c0_i32_0 = arith.constant 0 : i32
    return %arg0, %c0_i32 : i32, i32
  }
  func.func @transform_1(%arg0: i32) -> (i32, i32) {
    %c0_i32 = arith.constant 0 : i32
    %c0_i32_0 = arith.constant 0 : i32
    return %arg0, %c0_i32 : i32, i32
  }
  func.func @transform_2(%arg0: i32) -> (i32, i32) {
    %c0_i32 = arith.constant 0 : i32
    %c0_i32_0 = arith.constant 0 : i32
    %c0_i32_1 = arith.constant 0 : i32
    return %c0_i32, %c0_i32_0 : i32, i32
  }
  func.func @transform_3(%arg0: i32) -> (i32, i32) {
    %c0_i32 = arith.constant 0 : i32
    %c0_i32_0 = arith.constant 0 : i32
    %c0_i32_1 = arith.constant 0 : i32
    return %c0_i32, %c0_i32_0 : i32, i32
  }
  func.func @transform_4(%arg0: i32) -> (i32, i32) {
    %c0_i32 = arith.constant 0 : i32
    %c0_i32_0 = arith.constant 0 : i32
    %c0_i32_1 = arith.constant 0 : i32
    return %c0_i32, %c0_i32_0 : i32, i32
  }
  func.func @transform_5(%arg0: i32) -> (i32, i32) {
    %c0_i32 = arith.constant 0 : i32
    %c0_i32_0 = arith.constant 0 : i32
    %c0_i32_1 = arith.constant 0 : i32
    return %c0_i32, %c0_i32_0 : i32, i32
  }
  func.func @transform_6(%arg0: i32) -> (i32, i32) {
    %c0_i32 = arith.constant 0 : i32
    %c0_i32_0 = arith.constant 0 : i32
    %c0_i32_1 = arith.constant 0 : i32
    return %c0_i32, %c0_i32_0 : i32, i32
  }
  func.func @transform_7(%arg0: i32) -> (i32, i32) {
    %c0_i32 = arith.constant 0 : i32
    %c0_i32_0 = arith.constant 0 : i32
    %c0_i32_1 = arith.constant 0 : i32
    return %c0_i32, %c0_i32_0 : i32, i32
  }
  func.func @transform_8(%arg0: i32) -> (i32, i32) {
    %c0_i32 = arith.constant 0 : i32
    %c0_i32_0 = arith.constant 0 : i32
    %c0_i32_1 = arith.constant 0 : i32
    return %c0_i32, %c0_i32_0 : i32, i32
  }
  func.func @transform_9(%arg0: i32) -> (i32, i32) {
    %c0_i32 = arith.constant 0 : i32
    %c0_i32_0 = arith.constant 0 : i32
    return %c0_i32, %arg0 : i32, i32
  }
}

</mosaic_0001>

<llo_original>
// kernel: tpu_custom_call.1
$region0: #{tpu_custom_call.1}
  #allocation0 [shape = 'u32[]', space=smem, size = 0x4, offset = 0x4, fixed_abs, tag = 'smem constant byte address 0x4 - core index']
  #allocation1 [shape = 'u32[144,128]{1,0:T(1,128)}', space=vmem, size = 0x12000, scoped, tag = 'internal scratch']
  %s0 = inlined_call_operand.vmem [shape: f32[128,24], index: 0, kind: input, shape index: {}]
  %s1 = inlined_call_operand.vmem [shape: f32[128,8], index: 1, kind: input, shape index: {}]
  %s2 = inlined_call_operand.vmem [shape: f32[24,512], index: 2, kind: input, shape index: {}]
  %s3 = inlined_call_operand.vmem [shape: f32[8,512], index: 3, kind: input, shape index: {}]
  %s4 = inlined_call_operand.vmem [shape: f32[1,512], index: 4, kind: input, shape index: {}]
  %s5 = inlined_call_operand.hbm [shape: f32[512,512], index: 5, kind: input, shape index: {}]
  %s6 = inlined_call_operand.vmem [shape: f32[1,512], index: 6, kind: input, shape index: {}]
  %s7 = inlined_call_operand.vmem [shape: f32[2,512], index: 7, kind: input, shape index: {}]
  %s8 = inlined_call_operand.vmem [shape: f32[2,1], index: 8, kind: input, shape index: {}]
  %s9 = inlined_call_operand.hbm [shape: f32[2,128], index: 9, kind: output, shape index: {}]
  %s10 = sld [smem:[#allocation0]]
  $region50: #{tpu_custom_call.1} parent=0
    _
  %s12 = ssub.s32 1, %s10
  %s13 = scalar_select 0, %s12, %s10
  $region1: #{tpu_custom_call.1} parent=0
    #allocation2 [shape = 'u8[1048576]{0}', space=vmem, size = 0x100000, scoped, tag = 'input window, operand 5, single buffered']
    #allocation3 [shape = 's32[1]{0}', space=sflag, size = 0x4, scoped, tag = 'scoped memory for tpu_custom_call.1']
    #allocation4 [shape = 's32[1]{0}', space=sflag, size = 0x4, scoped, tag = 'scoped memory for tpu_custom_call.1']
    #allocation5 [shape = 'u8[1024]{0}', space=vmem, size = 0x400, scoped, tag = 'output window, operand 0, single buffered']
    %14 = vsyncpa [#allocation3], 0
    %15 = vsyncpa [#allocation4], 0
    // Predicated region
    $region2: #{tpu_custom_call.1} parent=1 // pred_check
      _
    $region3: #{tpu_custom_call.1} parent=1 // pred_check_branch
      %17 = sbr.rel (0) target = $region5
    $region4: #{tpu_custom_call.1} parent=1 // pred_region
      _
    $region5: #{tpu_custom_call.1} parent=1 // pred_fallthru
      _
    // Predicated region
    $region6: #{tpu_custom_call.1} parent=1 // pred_check
      _
    $region7: #{tpu_custom_call.1} parent=1 // pred_check_branch
      %19 = sbr.rel (0) target = $region9
    $region8: #{tpu_custom_call.1} parent=1 // pred_region
      _
    $region9: #{tpu_custom_call.1} parent=1 // pred_fallthru
      _
    // Predicated region
    $region10: #{tpu_custom_call.1} parent=1 // pred_check
      _
    $region11: #{tpu_custom_call.1} parent=1 // pred_check_branch
      %21 = sbr.rel (0) target = $region13
    $region12: #{tpu_custom_call.1} parent=1 // pred_region
      _
    $region13: #{tpu_custom_call.1} parent=1 // pred_fallthru
      _
    // Predicated region
    $region14: #{tpu_custom_call.1} parent=1 // pred_check
      _
    $region15: #{tpu_custom_call.1} parent=1 // pred_check_branch
      %23 = sbr.rel (0) target = $region17
    $region16: #{tpu_custom_call.1} parent=1 // pred_region
      _
    $region17: #{tpu_custom_call.1} parent=1 // pred_fallthru
      _
    // Predicated region
    $region18: #{tpu_custom_call.1} parent=1 // pred_check
      _
    $region19: #{tpu_custom_call.1} parent=1 // pred_check_branch
      %25 = sbr.rel (0) target = $region21
    $region20: #{tpu_custom_call.1} parent=1 // pred_region
      _
    $region21: #{tpu_custom_call.1} parent=1 // pred_fallthru
      _
    // Predicated region
    $region22: #{tpu_custom_call.1} parent=1 // pred_check
      _
    $region23: #{tpu_custom_call.1} parent=1 // pred_check_branch
      %27 = sbr.rel (0) target = $region25
    $region24: #{tpu_custom_call.1} parent=1 // pred_region
      %s29 = ssub.s32 32768, 32768
      %30 = vsyncadd [#allocation3], %s29
      %s31 = sshll.u32 [#allocation2], 4
      %s32 = int_to_ptr.vmem [resolvable:$true] %s31
      %37 = dma.hbm_to_vmem [thread:$0]  %s5, 32768, %s32, [#allocation3], 512, 512, 32
    $region25: #{tpu_custom_call.1} parent=1 // pred_fallthru
      _
    // Predicated region
    $region26: #{tpu_custom_call.1} parent=1 // pred_check
      _
    $region27: #{tpu_custom_call.1} parent=1 // pred_check_branch
      %39 = sbr.rel (0) target = $region29
    $region28: #{tpu_custom_call.1} parent=1 // pred_region
      _
    $region29: #{tpu_custom_call.1} parent=1 // pred_fallthru
      _
    // Predicated region
    $region30: #{tpu_custom_call.1} parent=1 // pred_check
      _
    $region31: #{tpu_custom_call.1} parent=1 // pred_check_branch
      %41 = sbr.rel (0) target = $region33
    $region32: #{tpu_custom_call.1} parent=1 // pred_region
      _
    $region33: #{tpu_custom_call.1} parent=1 // pred_fallthru
      _
    // Predicated region
    $region34: #{tpu_custom_call.1} parent=1 // pred_check
      _
    $region35: #{tpu_custom_call.1} parent=1 // pred_check_branch
      %43 = sbr.rel (0) target = $region37
    $region36: #{tpu_custom_call.1} parent=1 // pred_region
      _
    $region37: #{tpu_custom_call.1} parent=1 // pred_fallthru
      _
    // Predicated region
    $region38: #{tpu_custom_call.1} parent=1 // pred_check
      _
    $region39: #{tpu_custom_call.1} parent=1 // pred_check_branch
      %45 = sbr.rel (0) target = $region41
    $region40: #{tpu_custom_call.1} parent=1 // pred_region
      %46 = dma.done [#allocation3], 32768
    $region41: #{tpu_custom_call.1} parent=1 // pred_fallthru
      _
    %v47 = vld [vmem:[%s0] sm:$0xff]
    %v48 = vld [vmem:[%s0 + $0x8] sm:$0xff]
    %v49 = vld [vmem:[%s0 + $0x10] sm:$0xff]
    %v50 = vld [vmem:[%s0 + $0x18] sm:$0xff]
    %v51 = vld [vmem:[%s0 + $0x20] sm:$0xff]
    %v52 = vld [vmem:[%s0 + $0x28] sm:$0xff]
    %v53 = vld [vmem:[%s0 + $0x30] sm:$0xff]
    %v54 = vld [vmem:[%s0 + $0x38] sm:$0xff]
    %v55 = vld [vmem:[%s0 + $0x40] sm:$0xff]
    %v56 = vld [vmem:[%s0 + $0x48] sm:$0xff]
    %v57 = vld [vmem:[%s0 + $0x50] sm:$0xff]
    %v58 = vld [vmem:[%s0 + $0x58] sm:$0xff]
    %v59 = vld [vmem:[%s0 + $0x60] sm:$0xff]
    %v60 = vld [vmem:[%s0 + $0x68] sm:$0xff]
    %v61 = vld [vmem:[%s0 + $0x70] sm:$0xff]
    %v62 = vld [vmem:[%s0 + $0x78] sm:$0xff]
    %v63 = vld [vmem:[%s2] sm:$0xff]
    %v64 = vld [vmem:[%s2 + $0x8] sm:$0xff]
    %v65 = vld [vmem:[%s2 + $0x10] sm:$0xff]
    %v66 = vld [vmem:[%s2 + $0x18] sm:$0xff]
    %v67 = vld [vmem:[%s2 + $0x20] sm:$0xff]
    %v68 = vld [vmem:[%s2 + $0x28] sm:$0xff]
    %v69 = vld [vmem:[%s2 + $0x30] sm:$0xff]
    %v70 = vld [vmem:[%s2 + $0x38] sm:$0xff]
    %v71 = vld [vmem:[%s2 + $0x40] sm:$0xff]
    %v72 = vld [vmem:[%s2 + $0x48] sm:$0xff]
    %v73 = vld [vmem:[%s2 + $0x50] sm:$0xff]
    %v74 = vld [vmem:[%s2 + $0x58] sm:$0xff]
    %v75 = vld [vmem:[%s1] sm:$0xff]
    %v76 = vld [vmem:[%s1 + $0x8] sm:$0xff]
    %v77 = vld [vmem:[%s1 + $0x10] sm:$0xff]
    %v78 = vld [vmem:[%s1 + $0x18] sm:$0xff]
    %v79 = vld [vmem:[%s1 + $0x20] sm:$0xff]
    %v80 = vld [vmem:[%s1 + $0x28] sm:$0xff]
    %v81 = vld [vmem:[%s1 + $0x30] sm:$0xff]
    %v82 = vld [vmem:[%s1 + $0x38] sm:$0xff]
    %v83 = vld [vmem:[%s1 + $0x40] sm:$0xff]
    %v84 = vld [vmem:[%s1 + $0x48] sm:$0xff]
    %v85 = vld [vmem:[%s1 + $0x50] sm:$0xff]
    %v86 = vld [vmem:[%s1 + $0x58] sm:$0xff]
    %v87 = vld [vmem:[%s1 + $0x60] sm:$0xff]
    %v88 = vld [vmem:[%s1 + $0x68] sm:$0xff]
    %v89 = vld [vmem:[%s1 + $0x70] sm:$0xff]
    %v90 = vld [vmem:[%s1 + $0x78] sm:$0xff]
    %v91 = vld [vmem:[%s3] sm:$0xff]
    %v92 = vld [vmem:[%s3 + $0x8] sm:$0xff]
    %v93 = vld [vmem:[%s3 + $0x10] sm:$0xff]
    %v94 = vld [vmem:[%s3 + $0x18] sm:$0xff]
    %vm95 = vcmask 64512
    %v97 = vsel %vm95, %v75, 0
    %v100 = vsel %vm95, %v76, 0
    %v103 = vsel %vm95, %v77, 0
    %v106 = vsel %vm95, %v78, 0
    %v109 = vsel %vm95, %v79, 0
    %v112 = vsel %vm95, %v80, 0
    %v115 = vsel %vm95, %v81, 0
    %v118 = vsel %vm95, %v82, 0
    %v121 = vsel %vm95, %v83, 0
    %v124 = vsel %vm95, %v84, 0
    %v127 = vsel %vm95, %v85, 0
    %v130 = vsel %vm95, %v86, 0
    %v133 = vsel %vm95, %v87, 0
    %v136 = vsel %vm95, %v88, 0
    %v139 = vsel %vm95, %v89, 0
    %v142 = vsel %vm95, %v90, 0
    %144 = vmatprep.subr.mxu0 %v92
    %145 = vmatpush1.msra.mxu0 %v91
    %146 = vmatprep.subr.mxu0 0.0
    %147 = vmatpush1.msra.mxu0 0.0
    %148 = vmatprep.subr.mxu0 0.0
    %149 = vmatpush1.msra.mxu0 0.0
    %150 = vmatprep.subr.mxu0 0.0
    %151 = vmatpush1.msra.mxu0 0.0
    %152 = vmatprep.subr.mxu0 0.0
    %153 = vmatpush1.msra.mxu0 0.0
    %154 = vmatprep.subr.mxu0 0.0
    %155 = vmatpush1.msra.mxu0 0.0
    %156 = vmatprep.subr.mxu0 0.0
    %157 = vmatpush1.msra.mxu0 0.0
    %158 = vmatprep.subr.mxu0 0.0
    %159 = vmatpush1.msra.mxu0 0.0
    %160 = vmatprep.subr.mxu0 0.0
    %161 = vmatpush1.msra.mxu0 0.0
    %162 = vmatprep.subr.mxu0 0.0
    %163 = vmatpush1.msra.mxu0 0.0
    %164 = vmatprep.subr.mxu0 0.0
    %165 = vmatpush1.msra.mxu0 0.0
    %166 = vmatprep.subr.mxu0 0.0
    %167 = vmatpush1.msra.mxu0 0.0
    %168 = vmatprep.subr.mxu0 0.0
    %169 = vmatpush1.msra.mxu0 0.0
    %170 = vmatprep.subr.mxu0 0.0
    %171 = vmatpush1.msra.mxu0 0.0
    %172 = vmatprep.subr.mxu0 0.0
    %173 = vmatpush1.msra.mxu0 0.0
    %174 = vmatprep.subr.mxu0 0.0
    %175 = vmatpush1.msra.mxu0 0.0
    %176 = vmatprep.subr.mxu0 0.0
    %177 = vmatpush1.msra.mxu0 0.0
    %178 = vmatprep.subr.mxu0 0.0
    %179 = vmatpush1.msra.mxu0 0.0
    %180 = vmatprep.subr.mxu0 0.0
    %181 = vmatpush1.msra.mxu0 0.0
    %182 = vmatprep.subr.mxu0 0.0
    %183 = vmatpush1.msra.mxu0 0.0
    %184 = vmatprep.subr.mxu0 0.0
    %185 = vmatpush1.msra.mxu0 0.0
    %186 = vmatprep.subr.mxu0 0.0
    %187 = vmatpush1.msra.mxu0 0.0
    %188 = vmatprep.subr.mxu0 0.0
    %189 = vmatpush1.msra.mxu0 0.0
    %190 = vmatprep.subr.mxu0 0.0
    %191 = vmatpush1.msra.mxu0 0.0
    %192 = vmatprep.subr.mxu0 0.0
    %193 = vmatpush1.msra.mxu0 0.0
    %194 = vmatprep.subr.mxu0 0.0
    %195 = vmatpush1.msra.mxu0 0.0
    %196 = vmatprep.subr.mxu0 0.0
    %197 = vmatpush1.msra.mxu0 0.0
    %198 = vmatprep.subr.mxu0 0.0
    %199 = vmatpush1.msra.mxu0 0.0
    %200 = vmatprep.subr.mxu0 0.0
    %201 = vmatpush1.msra.mxu0 0.0
    %202 = vmatprep.subr.mxu0 0.0
    %203 = vmatpush1.msra.mxu0 0.0
    %204 = vmatprep.subr.mxu0 0.0
    %205 = vmatpush1.msra.mxu0 0.0
    %206 = vmatprep.subr.mxu0 0.0
    %207 = vmatpush1.msra.mxu0 0.0
    %208 = vmatprep.mubr.f32.mxu0 0.0
    %209 = vmatmul.mubr.f32.gmra.mrb[0].mxu0 %v97
    %v210 = vpop.f32.mrb[0].mxu0
    %v211 = vadd.f32 0.0, %v210
    %v212 = vpop.f32.mrb[0].mxu0
    %v213 = vadd.f32 0.0, %v212
    %214 = vmatprep.mubr.f32.mxu0 0.0
    %215 = vmatmul.mubr.f32.gmra.mrb[0].mxu0 %v100
    %v216 = vpop.f32.mrb[0].mxu0
    %v217 = vadd.f32 0.0, %v216
    %v218 = vpop.f32.mrb[0].mxu0
    %v219 = vadd.f32 0.0, %v218
    %220 = vmatprep.mubr.f32.mxu0 0.0
    %221 = vmatmul.mubr.f32.gmra.mrb[0].mxu0 %v103
    %v222 = vpop.f32.mrb[0].mxu0
    %v223 = vadd.f32 0.0, %v222
    %v224 = vpop.f32.mrb[0].mxu0
    %v225 = vadd.f32 0.0, %v224
    %226 = vmatprep.mubr.f32.mxu0 0.0
    %227 = vmatmul.mubr.f32.gmra.mrb[0].mxu0 %v106
    %v228 = vpop.f32.mrb[0].mxu0
    %v229 = vadd.f32 0.0, %v228
    %v230 = vpop.f32.mrb[0].mxu0
    %v231 = vadd.f32 0.0, %v230
    %232 = vmatprep.mubr.f32.mxu0 0.0
    %233 = vmatmul.mubr.f32.gmra.mrb[0].mxu0 %v109
    %v234 = vpop.f32.mrb[0].mxu0
    %v235 = vadd.f32 0.0, %v234
    %v236 = vpop.f32.mrb[0].mxu0
    %v237 = vadd.f32 0.0, %v236
    %238 = vmatprep.mubr.f32.mxu0 0.0
    %239 = vmatmul.mubr.f32.gmra.mrb[0].mxu0 %v112
    %v240 = vpop.f32.mrb[0].mxu0
    %v241 = vadd.f32 0.0, %v240
    %v242 = vpop.f32.mrb[0].mxu0
    %v243 = vadd.f32 0.0, %v242
    %244 = vmatprep.mubr.f32.mxu0 0.0
    %245 = vmatmul.mubr.f32.gmra.mrb[0].mxu0 %v115
    %v246 = vpop.f32.mrb[0].mxu0
    %v247 = vadd.f32 0.0, %v246
    %v248 = vpop.f32.mrb[0].mxu0
    %v249 = vadd.f32 0.0, %v248
    %250 = vmatprep.mubr.f32.mxu0 0.0
    %251 = vmatmul.mubr.f32.gmra.mrb[0].mxu0 %v118
    %v252 = vpop.f32.mrb[0].mxu0
    %v253 = vadd.f32 0.0, %v252
    %v254 = vpop.f32.mrb[0].mxu0
    %v255 = vadd.f32 0.0, %v254
    %256 = vmatprep.mubr.f32.mxu0 0.0
    %257 = vmatmul.mubr.f32.gmra.mrb[0].mxu0 %v121
    %v258 = vpop.f32.mrb[0].mxu0
    %v259 = vadd.f32 0.0, %v258
    %v260 = vpop.f32.mrb[0].mxu0
    %v261 = vadd.f32 0.0, %v260
    %262 = vmatprep.mubr.f32.mxu0 0.0
    %263 = vmatmul.mubr.f32.gmra.mrb[0].mxu0 %v124
    %v264 = vpop.f32.mrb[0].mxu0
    %v265 = vadd.f32 0.0, %v264
    %v266 = vpop.f32.mrb[0].mxu0
    %v267 = vadd.f32 0.0, %v266
    %268 = vmatprep.mubr.f32.mxu0 0.0
    %269 = vmatmul.mubr.f32.gmra.mrb[0].mxu0 %v127
    %v270 = vpop.f32.mrb[0].mxu0
    %v271 = vadd.f32 0.0, %v270
    %v272 = vpop.f32.mrb[0].mxu0
    %v273 = vadd.f32 0.0, %v272
    %274 = vmatprep.mubr.f32.mxu0 0.0
    %275 = vmatmul.mubr.f32.gmra.mrb[0].mxu0 %v130
    %v276 = vpop.f32.mrb[0].mxu0
    %v277 = vadd.f32 0.0, %v276
    %v278 = vpop.f32.mrb[0].mxu0
    %v279 = vadd.f32 0.0, %v278
    %280 = vmatprep.mubr.f32.mxu0 0.0
    %281 = vmatmul.mubr.f32.gmra.mrb[0].mxu0 %v133
    %v282 = vpop.f32.mrb[0].mxu0
    %v283 = vadd.f32 0.0, %v282
    %v284 = vpop.f32.mrb[0].mxu0
    %v285 = vadd.f32 0.0, %v284
    %286 = vmatprep.mubr.f32.mxu0 0.0
    %287 = vmatmul.mubr.f32.gmra.mrb[0].mxu0 %v136
    %v288 = vpop.f32.mrb[0].mxu0
    %v289 = vadd.f32 0.0, %v288
    %v290 = vpop.f32.mrb[0].mxu0
    %v291 = vadd.f32 0.0, %v290
    %292 = vmatprep.mubr.f32.mxu0 0.0
    %293 = vmatmul.mubr.f32.gmra.mrb[0].mxu0 %v139
    %v294 = vpop.f32.mrb[0].mxu0
    %v295 = vadd.f32 0.0, %v294
    %v296 = vpop.f32.mrb[0].mxu0
    %v297 = vadd.f32 0.0, %v296
    %298 = vmatprep.mubr.f32.mxu0 0.0
    %299 = vmatmul.mubr.f32.gmra.mrb[0].mxu0 %v142
    %v300 = vpop.f32.mrb[0].mxu0
    %v301 = vadd.f32 0.0, %v300
    %v302 = vpop.f32.mrb[0].mxu0
    %v303 = vadd.f32 0.0, %v302
    %304 = vdwg.mxu0
    %305 = vmatprep.subr.mxu0 %v94
    %306 = vmatpush1.msra.mxu0 %v93
    %307 = vmatprep.subr.mxu0 0.0
    %308 = vmatpush1.msra.mxu0 0.0
    %309 = vmatprep.subr.mxu0 0.0
    %310 = vmatpush1.msra.mxu0 0.0
    %311 = vmatprep.subr.mxu0 0.0
    %312 = vmatpush1.msra.mxu0 0.0
    %313 = vmatprep.subr.mxu0 0.0
    %314 = vmatpush1.msra.mxu0 0.0
    %315 = vmatprep.subr.mxu0 0.0
    %316 = vmatpush1.msra.mxu0 0.0
    %317 = vmatprep.subr.mxu0 0.0
    %318 = vmatpush1.msra.mxu0 0.0
    %319 = vmatprep.subr.mxu0 0.0
    %320 = vmatpush1.msra.mxu0 0.0
    %321 = vmatprep.subr.mxu0 0.0
    %322 = vmatpush1.msra.mxu0 0.0
    %323 = vmatprep.subr.mxu0 0.0
    %324 = vmatpush1.msra.mxu0 0.0
    %325 = vmatprep.subr.mxu0 0.0
    %326 = vmatpush1.msra.mxu0 0.0
    %327 = vmatprep.subr.mxu0 0.0
    %328 = vmatpush1.msra.mxu0 0.0
    %329 = vmatprep.subr.mxu0 0.0
    %330 = vmatpush1.msra.mxu0 0.0
    %331 = vmatprep.subr.mxu0 0.0
    %332 = vmatpush1.msra.mxu0 0.0
    %333 = vmatprep.subr.mxu0 0.0
    %334 = vmatpush1.msra.mxu0 0.0
    %335 = vmatprep.subr.mxu0 0.0
    %336 = vmatpush1.msra.mxu0 0.0
    %337 = vmatprep.subr.mxu0 0.0
    %338 = vmatpush1.msra.mxu0 0.0
    %339 = vmatprep.subr.mxu0 0.0
    %340 = vmatpush1.msra.mxu0 0.0
    %341 = vmatprep.subr.mxu0 0.0
    %342 = vmatpush1.msra.mxu0 0.0
    %343 = vmatprep.subr.mxu0 0.0
    %344 = vmatpush1.msra.mxu0 0.0
    %345 = vmatprep.subr.mxu0 0.0
    %346 = vmatpush1.msra.mxu0 0.0
    %347 = vmatprep.subr.mxu0 0.0
    %348 = vmatpush1.msra.mxu0 0.0
    %349 = vmatprep.subr.mxu0 0.0
    %350 = vmatpush1.msra.mxu0 0.0
    %351 = vmatprep.subr.mxu0 0.0
    %352 = vmatpush1.msra.mxu0 0.0
    %353 = vmatprep.subr.mxu0 0.0
    %354 = vmatpush1.msra.mxu0 0.0
    %355 = vmatprep.subr.mxu0 0.0
    %356 = vmatpush1.msra.mxu0 0.0
    %357 = vmatprep.subr.mxu0 0.0
    %358 = vmatpush1.msra.mxu0 0.0
    %359 = vmatprep.subr.mxu0 0.0
    %360 = vmatpush1.msra.mxu0 0.0
    %361 = vmatprep.subr.mxu0 0.0
    %362 = vmatpush1.msra.mxu0 0.0
    %363 = vmatprep.subr.mxu0 0.0
    %364 = vmatpush1.msra.mxu0 0.0
    %365 = vmatprep.subr.mxu0 0.0
    %366 = vmatpush1.msra.mxu0 0.0
    %367 = vmatprep.subr.mxu0 0.0
    %368 = vmatpush1.msra.mxu0 0.0
    %369 = vmatprep.mubr.f32.mxu0 0.0
    %370 = vmatmul.mubr.f32.gmra.mrb[0].mxu0 %v97
    %v371 = vpop.f32.mrb[0].mxu0
    %v372 = vadd.f32 0.0, %v371
    %v373 = vpop.f32.mrb[0].mxu0
    %v374 = vadd.f32 0.0, %v373
    %375 = vmatprep.mubr.f32.mxu0 0.0
    %376 = vmatmul.mubr.f32.gmra.mrb[0].mxu0 %v100
    %v377 = vpop.f32.mrb[0].mxu0
    %v378 = vadd.f32 0.0, %v377
    %v379 = vpop.f32.mrb[0].mxu0
    %v380 = vadd.f32 0.0, %v379
    %381 = vmatprep.mubr.f32.mxu0 0.0
    %382 = vmatmul.mubr.f32.gmra.mrb[0].mxu0 %v103
    %v383 = vpop.f32.mrb[0].mxu0
    %v384 = vadd.f32 0.0, %v383
    %v385 = vpop.f32.mrb[0].mxu0
    %v386 = vadd.f32 0.0, %v385
    %387 = vmatprep.mubr.f32.mxu0 0.0
    %388 = vmatmul.mubr.f32.gmra.mrb[0].mxu0 %v106
    %v389 = vpop.f32.mrb[0].mxu0
    %v390 = vadd.f32 0.0, %v389
    %v391 = vpop.f32.mrb[0].mxu0
    %v392 = vadd.f32 0.0, %v391
    %393 = vmatprep.mubr.f32.mxu0 0.0
    %394 = vmatmul.mubr.f32.gmra.mrb[0].mxu0 %v109
    %v395 = vpop.f32.mrb[0].mxu0
    %v396 = vadd.f32 0.0, %v395
    %v397 = vpop.f32.mrb[0].mxu0
    %v398 = vadd.f32 0.0, %v397
    %399 = vmatprep.mubr.f32.mxu0 0.0
    %400 = vmatmul.mubr.f32.gmra.mrb[0].mxu0 %v112
    %v401 = vpop.f32.mrb[0].mxu0
    %v402 = vadd.f32 0.0, %v401
    %v403 = vpop.f32.mrb[0].mxu0
    %v404 = vadd.f32 0.0, %v403
    %405 = vmatprep.mubr.f32.mxu0 0.0
    %406 = vmatmul.mubr.f32.gmra.mrb[0].mxu0 %v115
    %v407 = vpop.f32.mrb[0].mxu0
    %v408 = vadd.f32 0.0, %v407
    %v409 = vpop.f32.mrb[0].mxu0
    %v410 = vadd.f32 0.0, %v409
    %411 = vmatprep.mubr.f32.mxu0 0.0
    %412 = vmatmul.mubr.f32.gmra.mrb[0].mxu0 %v118
    %v413 = vpop.f32.mrb[0].mxu0
    %v414 = vadd.f32 0.0, %v413
    %v415 = vpop.f32.mrb[0].mxu0
    %v416 = vadd.f32 0.0, %v415
    %417 = vmatprep.mubr.f32.mxu0 0.0
    %418 = vmatmul.mubr.f32.gmra.mrb[0].mxu0 %v121
    %v419 = vpop.f32.mrb[0].mxu0
    %v420 = vadd.f32 0.0, %v419
    %v421 = vpop.f32.mrb[0].mxu0
    %v422 = vadd.f32 0.0, %v421
    %423 = vmatprep.mubr.f32.mxu0 0.0
    %424 = vmatmul.mubr.f32.gmra.mrb[0].mxu0 %v124
    %v425 = vpop.f32.mrb[0].mxu0
    %v426 = vadd.f32 0.0, %v425
    %v427 = vpop.f32.mrb[0].mxu0
    %v428 = vadd.f32 0.0, %v427
    %429 = vmatprep.mubr.f32.mxu0 0.0
    %430 = vmatmul.mubr.f32.gmra.mrb[0].mxu0 %v127
    %v431 = vpop.f32.mrb[0].mxu0
    %v432 = vadd.f32 0.0, %v431
    %v433 = vpop.f32.mrb[0].mxu0
    %v434 = vadd.f32 0.0, %v433
    %435 = vmatprep.mubr.f32.mxu0 0.0
    %436 = vmatmul.mubr.f32.gmra.mrb[0].mxu0 %v130
    %v437 = vpop.f32.mrb[0].mxu0
    %v438 = vadd.f32 0.0, %v437
    %v439 = vpop.f32.mrb[0].mxu0
    %v440 = vadd.f32 0.0, %v439
    %441 = vmatprep.mubr.f32.mxu0 0.0
    %442 = vmatmul.mubr.f32.gmra.mrb[0].mxu0 %v133
    %v443 = vpop.f32.mrb[0].mxu0
    %v444 = vadd.f32 0.0, %v443
    %v445 = vpop.f32.mrb[0].mxu0
    %v446 = vadd.f32 0.0, %v445
    %447 = vmatprep.mubr.f32.mxu0 0.0
    %448 = vmatmul.mubr.f32.gmra.mrb[0].mxu0 %v136
    %v449 = vpop.f32.mrb[0].mxu0
    %v450 = vadd.f32 0.0, %v449
    %v451 = vpop.f32.mrb[0].mxu0
    %v452 = vadd.f32 0.0, %v451
    %453 = vmatprep.mubr.f32.mxu0 0.0
    %454 = vmatmul.mubr.f32.gmra.mrb[0].mxu0 %v139
    %v455 = vpop.f32.mrb[0].mxu0
    %v456 = vadd.f32 0.0, %v455
    %v457 = vpop.f32.mrb[0].mxu0
    %v458 = vadd.f32 0.0, %v457
    %459 = vmatprep.mubr.f32.mxu0 0.0
    %460 = vmatmul.mubr.f32.gmra.mrb[0].mxu0 %v142
    %v461 = vpop.f32.mrb[0].mxu0
    %v462 = vadd.f32 0.0, %v461
    %v463 = vpop.f32.mrb[0].mxu0
    %v464 = vadd.f32 0.0, %v463
    %465 = vdwg.mxu0
    %vm466 = vcmask 195584
    %v468 = vsel %vm466, %v47, 0
    %v471 = vsel %vm466, %v48, 0
    %v474 = vsel %vm466, %v49, 0
    %v477 = vsel %vm466, %v50, 0
    %v480 = vsel %vm466, %v51, 0
    %v483 = vsel %vm466, %v52, 0
    %v486 = vsel %vm466, %v53, 0
    %v489 = vsel %vm466, %v54, 0
    %v492 = vsel %vm466, %v55, 0
    %v495 = vsel %vm466, %v56, 0
    %v498 = vsel %vm466, %v57, 0
    %v501 = vsel %vm466, %v58, 0
    %v504 = vsel %vm466, %v59, 0
    %v507 = vsel %vm466, %v60, 0
    %v510 = vsel %vm466, %v61, 0
    %v513 = vsel %vm466, %v62, 0
    %515 = vmatprep.subr.mxu0 %v64
    %516 = vmatpush1.msra.mxu0 %v63
    %517 = vmatprep.subr.mxu0 %v68
    %518 = vmatpush1.msra.mxu0 %v67
    %519 = vmatprep.subr.mxu0 %v72
    %520 = vmatpush1.msra.mxu0 %v71
    %521 = vmatprep.subr.mxu0 0.0
    %522 = vmatpush1.msra.mxu0 0.0
    %523 = vmatprep.subr.mxu0 0.0
    %524 = vmatpush1.msra.mxu0 0.0
    %525 = vmatprep.subr.mxu0 0.0
    %526 = vmatpush1.msra.mxu0 0.0
    %527 = vmatprep.subr.mxu0 0.0
    %528 = vmatpush1.msra.mxu0 0.0
    %529 = vmatprep.subr.mxu0 0.0
    %530 = vmatpush1.msra.mxu0 0.0
    %531 = vmatprep.subr.mxu0 0.0
    %532 = vmatpush1.msra.mxu0 0.0
    %533 = vmatprep.subr.mxu0 0.0
    %534 = vmatpush1.msra.mxu0 0.0
    %535 = vmatprep.subr.mxu0 0.0
    %536 = vmatpush1.msra.mxu0 0.0
    %537 = vmatprep.subr.mxu0 0.0
    %538 = vmatpush1.msra.mxu0 0.0
    %539 = vmatprep.subr.mxu0 0.0
    %540 = vmatpush1.msra.mxu0 0.0
    %541 = vmatprep.subr.mxu0 0.0
    %542 = vmatpush1.msra.mxu0 0.0
    %543 = vmatprep.subr.mxu0 0.0
    %544 = vmatpush1.msra.mxu0 0.0
    %545 = vmatprep.subr.mxu0 0.0
    %546 = vmatpush1.msra.mxu0 0.0
    %547 = vmatprep.subr.mxu0 0.0
    %548 = vmatpush1.msra.mxu0 0.0
    %549 = vmatprep.subr.mxu0 0.0
    %550 = vmatpush1.msra.mxu0 0.0
    %551 = vmatprep.subr.mxu0 0.0
    %552 = vmatpush1.msra.mxu0 0.0
    %553 = vmatprep.subr.mxu0 0.0
    %554 = vmatpush1.msra.mxu0 0.0
    %555 = vmatprep.subr.mxu0 0.0
    %556 = vmatpush1.msra.mxu0 0.0
    %557 = vmatprep.subr.mxu0 0.0
    %558 = vmatpush1.msra.mxu0 0.0
    %559 = vmatprep.subr.mxu0 0.0
    %560 = vmatpush1.msra.mxu0 0.0
    %561 = vmatprep.subr.mxu0 0.0
    %562 = vmatpush1.msra.mxu0 0.0
    %563 = vmatprep.subr.mxu0 0.0
    %564 = vmatpush1.msra.mxu0 0.0
    %565 = vmatprep.subr.mxu0 0.0
    %566 = vmatpush1.msra.mxu0 0.0
    %567 = vmatprep.subr.mxu0 0.0
    %568 = vmatpush1.msra.mxu0 0.0
    %569 = vmatprep.subr.mxu0 0.0
    %570 = vmatpush1.msra.mxu0 0.0
    %571 = vmatprep.subr.mxu0 0.0
    %572 = vmatpush1.msra.mxu0 0.0
    %573 = vmatprep.subr.mxu0 0.0
    %574 = vmatpush1.msra.mxu0 0.0
    %575 = vmatprep.subr.mxu0 0.0
    %576 = vmatpush1.msra.mxu0 0.0
    %577 = vmatprep.subr.mxu0 0.0
    %578 = vmatpush1.msra.mxu0 0.0
    %579 = vmatprep.mubr.f32.mxu0 0.0
    %580 = vmatmul.mubr.f32.gmra.mrb[0].mxu0 %v468
    %v581 = vpop.f32.mrb[0].mxu0
    %v582 = vadd.f32 %v211, %v581
    %v583 = vpop.f32.mrb[0].mxu0
    %v584 = vadd.f32 %v213, %v583
    %585 = vmatprep.mubr.f32.mxu0 0.0
    %586 = vmatmul.mubr.f32.gmra.mrb[0].mxu0 %v471
    %v587 = vpop.f32.mrb[0].mxu0
    %v588 = vadd.f32 %v217, %v587
    %v589 = vpop.f32.mrb[0].mxu0
    %v590 = vadd.f32 %v219, %v589
    %591 = vmatprep.mubr.f32.mxu0 0.0
    %592 = vmatmul.mubr.f32.gmra.mrb[0].mxu0 %v474
    %v593 = vpop.f32.mrb[0].mxu0
    %v594 = vadd.f32 %v223, %v593
    %v595 = vpop.f32.mrb[0].mxu0
    %v596 = vadd.f32 %v225, %v595
    %597 = vmatprep.mubr.f32.mxu0 0.0
    %598 = vmatmul.mubr.f32.gmra.mrb[0].mxu0 %v477
    %v599 = vpop.f32.mrb[0].mxu0
    %v600 = vadd.f32 %v229, %v599
    %v601 = vpop.f32.mrb[0].mxu0
    %v602 = vadd.f32 %v231, %v601
    %603 = vmatprep.mubr.f32.mxu0 0.0
    %604 = vmatmul.mubr.f32.gmra.mrb[0].mxu0 %v480
    %v605 = vpop.f32.mrb[0].mxu0
    %v606 = vadd.f32 %v235, %v605
    %v607 = vpop.f32.mrb[0].mxu0
    %v608 = vadd.f32 %v237, %v607
    %609 = vmatprep.mubr.f32.mxu0 0.0
    %610 = vmatmul.mubr.f32.gmra.mrb[0].mxu0 %v483
    %v611 = vpop.f32.mrb[0].mxu0
    %v612 = vadd.f32 %v241, %v611
    %v613 = vpop.f32.mrb[0].mxu0
    %v614 = vadd.f32 %v243, %v613
    %615 = vmatprep.mubr.f32.mxu0 0.0
    %616 = vmatmul.mubr.f32.gmra.mrb[0].mxu0 %v486
    %v617 = vpop.f32.mrb[0].mxu0
    %v618 = vadd.f32 %v247, %v617
    %v619 = vpop.f32.mrb[0].mxu0
    %v620 = vadd.f32 %v249, %v619
    %621 = vmatprep.mubr.f32.mxu0 0.0
    %622 = vmatmul.mubr.f32.gmra.mrb[0].mxu0 %v489
    %v623 = vpop.f32.mrb[0].mxu0
    %v624 = vadd.f32 %v253, %v623
    %v625 = vpop.f32.mrb[0].mxu0
    %v626 = vadd.f32 %v255, %v625
    %627 = vmatprep.mubr.f32.mxu0 0.0
    %628 = vmatmul.mubr.f32.gmra.mrb[0].mxu0 %v492
    %v629 = vpop.f32.mrb[0].mxu0
    %v630 = vadd.f32 %v259, %v629
    %v631 = vpop.f32.mrb[0].mxu0
    %v632 = vadd.f32 %v261, %v631
    %633 = vmatprep.mubr.f32.mxu0 0.0
    %634 = vmatmul.mubr.f32.gmra.mrb[0].mxu0 %v495
    %v635 = vpop.f32.mrb[0].mxu0
    %v636 = vadd.f32 %v265, %v635
    %v637 = vpop.f32.mrb[0].mxu0
    %v638 = vadd.f32 %v267, %v637
    %639 = vmatprep.mubr.f32.mxu0 0.0
    %640 = vmatmul.mubr.f32.gmra.mrb[0].mxu0 %v498
    %v641 = vpop.f32.mrb[0].mxu0
    %v642 = vadd.f32 %v271, %v641
    %v643 = vpop.f32.mrb[0].mxu0
    %v644 = vadd.f32 %v273, %v643
    %645 = vmatprep.mubr.f32.mxu0 0.0
    %646 = vmatmul.mubr.f32.gmra.mrb[0].mxu0 %v501
    %v647 = vpop.f32.mrb[0].mxu0
    %v648 = vadd.f32 %v277, %v647
    %v649 = vpop.f32.mrb[0].mxu0
    %v650 = vadd.f32 %v279, %v649
    %651 = vmatprep.mubr.f32.mxu0 0.0
    %652 = vmatmul.mubr.f32.gmra.mrb[0].mxu0 %v504
    %v653 = vpop.f32.mrb[0].mxu0
    %v654 = vadd.f32 %v283, %v653
    %v655 = vpop.f32.mrb[0].mxu0
    %v656 = vadd.f32 %v285, %v655
    %657 = vmatprep.mubr.f32.mxu0 0.0
    %658 = vmatmul.mubr.f32.gmra.mrb[0].mxu0 %v507
    %v659 = vpop.f32.mrb[0].mxu0
    %v660 = vadd.f32 %v289, %v659
    %v661 = vpop.f32.mrb[0].mxu0
    %v662 = vadd.f32 %v291, %v661
    %663 = vmatprep.mubr.f32.mxu0 0.0
    %664 = vmatmul.mubr.f32.gmra.mrb[0].mxu0 %v510
    %v665 = vpop.f32.mrb[0].mxu0
    %v666 = vadd.f32 %v295, %v665
    %v667 = vpop.f32.mrb[0].mxu0
    %v668 = vadd.f32 %v297, %v667
    %669 = vmatprep.mubr.f32.mxu0 0.0
    %670 = vmatmul.mubr.f32.gmra.mrb[0].mxu0 %v513
    %v671 = vpop.f32.mrb[0].mxu0
    %v672 = vadd.f32 %v301, %v671
    %v673 = vpop.f32.mrb[0].mxu0
    %v674 = vadd.f32 %v303, %v673
    %675 = vdwg.mxu0
    %676 = vmatprep.subr.mxu0 %v66
    %677 = vmatpush1.msra.mxu0 %v65
    %678 = vmatprep.subr.mxu0 %v70
    %679 = vmatpush1.msra.mxu0 %v69
    %680 = vmatprep.subr.mxu0 %v74
    %681 = vmatpush1.msra.mxu0 %v73
    %682 = vmatprep.subr.mxu0 0.0
    %683 = vmatpush1.msra.mxu0 0.0
    %684 = vmatprep.subr.mxu0 0.0
    %685 = vmatpush1.msra.mxu0 0.0
    %686 = vmatprep.subr.mxu0 0.0
    %687 = vmatpush1.msra.mxu0 0.0
    %688 = vmatprep.subr.mxu0 0.0
    %689 = vmatpush1.msra.mxu0 0.0
    %690 = vmatprep.subr.mxu0 0.0
    %691 = vmatpush1.msra.mxu0 0.0
    %692 = vmatprep.subr.mxu0 0.0
    %693 = vmatpush1.msra.mxu0 0.0
    %694 = vmatprep.subr.mxu0 0.0
    %695 = vmatpush1.msra.mxu0 0.0
    %696 = vmatprep.subr.mxu0 0.0
    %697 = vmatpush1.msra.mxu0 0.0
    %698 = vmatprep.subr.mxu0 0.0
    %699 = vmatpush1.msra.mxu0 0.0
    %700 = vmatprep.subr.mxu0 0.0
    %701 = vmatpush1.msra.mxu0 0.0
    %702 = vmatprep.subr.mxu0 0.0
    %703 = vmatpush1.msra.mxu0 0.0
    %704 = vmatprep.subr.mxu0 0.0
    %705 = vmatpush1.msra.mxu0 0.0
    %706 = vmatprep.subr.mxu0 0.0
    %707 = vmatpush1.msra.mxu0 0.0
    %708 = vmatprep.subr.mxu0 0.0
    %709 = vmatpush1.msra.mxu0 0.0
    %710 = vmatprep.subr.mxu0 0.0
    %711 = vmatpush1.msra.mxu0 0.0
    %712 = vmatprep.subr.mxu0 0.0
    %713 = vmatpush1.msra.mxu0 0.0
    %714 = vmatprep.subr.mxu0 0.0
    %715 = vmatpush1.msra.mxu0 0.0
    %716 = vmatprep.subr.mxu0 0.0
    %717 = vmatpush1.msra.mxu0 0.0
    %718 = vmatprep.subr.mxu0 0.0
    %719 = vmatpush1.msra.mxu0 0.0
    %720 = vmatprep.subr.mxu0 0.0
    %721 = vmatpush1.msra.mxu0 0.0
    %722 = vmatprep.subr.mxu0 0.0
    %723 = vmatpush1.msra.mxu0 0.0
    %724 = vmatprep.subr.mxu0 0.0
    %725 = vmatpush1.msra.mxu0 0.0
    %726 = vmatprep.subr.mxu0 0.0
    %727 = vmatpush1.msra.mxu0 0.0
    %728 = vmatprep.subr.mxu0 0.0
    %729 = vmatpush1.msra.mxu0 0.0
    %730 = vmatprep.subr.mxu0 0.0
    %731 = vmatpush1.msra.mxu0 0.0
    %732 = vmatprep.subr.mxu0 0.0
    %733 = vmatpush1.msra.mxu0 0.0
    %734 = vmatprep.subr.mxu0 0.0
    %735 = vmatpush1.msra.mxu0 0.0
    %736 = vmatprep.subr.mxu0 0.0
    %737 = vmatpush1.msra.mxu0 0.0
    %738 = vmatprep.subr.mxu0 0.0
    %739 = vmatpush1.msra.mxu0 0.0
    %740 = vmatprep.mubr.f32.mxu0 0.0
    %741 = vmatmul.mubr.f32.gmra.mrb[0].mxu0 %v468
    %v742 = vpop.f32.mrb[0].mxu0
    %v743 = vadd.f32 %v372, %v742
    %v744 = vpop.f32.mrb[0].mxu0
    %v745 = vadd.f32 %v374, %v744
    %746 = vmatprep.mubr.f32.mxu0 0.0
    %747 = vmatmul.mubr.f32.gmra.mrb[0].mxu0 %v471
    %v748 = vpop.f32.mrb[0].mxu0
    %v749 = vadd.f32 %v378, %v748
    %v750 = vpop.f32.mrb[0].mxu0
    %v751 = vadd.f32 %v380, %v750
    %752 = vmatprep.mubr.f32.mxu0 0.0
    %753 = vmatmul.mubr.f32.gmra.mrb[0].mxu0 %v474
    %v754 = vpop.f32.mrb[0].mxu0
    %v755 = vadd.f32 %v384, %v754
    %v756 = vpop.f32.mrb[0].mxu0
    %v757 = vadd.f32 %v386, %v756
    %758 = vmatprep.mubr.f32.mxu0 0.0
    %759 = vmatmul.mubr.f32.gmra.mrb[0].mxu0 %v477
    %v760 = vpop.f32.mrb[0].mxu0
    %v761 = vadd.f32 %v390, %v760
    %v762 = vpop.f32.mrb[0].mxu0
    %v763 = vadd.f32 %v392, %v762
    %764 = vmatprep.mubr.f32.mxu0 0.0
    %765 = vmatmul.mubr.f32.gmra.mrb[0].mxu0 %v480
    %v766 = vpop.f32.mrb[0].mxu0
    %v767 = vadd.f32 %v396, %v766
    %v768 = vpop.f32.mrb[0].mxu0
    %v769 = vadd.f32 %v398, %v768
    %770 = vmatprep.mubr.f32.mxu0 0.0
    %771 = vmatmul.mubr.f32.gmra.mrb[0].mxu0 %v483
    %v772 = vpop.f32.mrb[0].mxu0
    %v773 = vadd.f32 %v402, %v772
    %v774 = vpop.f32.mrb[0].mxu0
    %v775 = vadd.f32 %v404, %v774
    %776 = vmatprep.mubr.f32.mxu0 0.0
    %777 = vmatmul.mubr.f32.gmra.mrb[0].mxu0 %v486
    %v778 = vpop.f32.mrb[0].mxu0
    %v779 = vadd.f32 %v408, %v778
    %v780 = vpop.f32.mrb[0].mxu0
    %v781 = vadd.f32 %v410, %v780
    %782 = vmatprep.mubr.f32.mxu0 0.0
    %783 = vmatmul.mubr.f32.gmra.mrb[0].mxu0 %v489
    %v784 = vpop.f32.mrb[0].mxu0
    %v785 = vadd.f32 %v414, %v784
    %v786 = vpop.f32.mrb[0].mxu0
    %v787 = vadd.f32 %v416, %v786
    %788 = vmatprep.mubr.f32.mxu0 0.0
    %789 = vmatmul.mubr.f32.gmra.mrb[0].mxu0 %v492
    %v790 = vpop.f32.mrb[0].mxu0
    %v791 = vadd.f32 %v420, %v790
    %v792 = vpop.f32.mrb[0].mxu0
    %v793 = vadd.f32 %v422, %v792
    %794 = vmatprep.mubr.f32.mxu0 0.0
    %795 = vmatmul.mubr.f32.gmra.mrb[0].mxu0 %v495
    %v796 = vpop.f32.mrb[0].mxu0
    %v797 = vadd.f32 %v426, %v796
    %v798 = vpop.f32.mrb[0].mxu0
    %v799 = vadd.f32 %v428, %v798
    %800 = vmatprep.mubr.f32.mxu0 0.0
    %801 = vmatmul.mubr.f32.gmra.mrb[0].mxu0 %v498
    %v802 = vpop.f32.mrb[0].mxu0
    %v803 = vadd.f32 %v432, %v802
    %v804 = vpop.f32.mrb[0].mxu0
    %v805 = vadd.f32 %v434, %v804
    %806 = vmatprep.mubr.f32.mxu0 0.0
    %807 = vmatmul.mubr.f32.gmra.mrb[0].mxu0 %v501
    %v808 = vpop.f32.mrb[0].mxu0
    %v809 = vadd.f32 %v438, %v808
    %v810 = vpop.f32.mrb[0].mxu0
    %v811 = vadd.f32 %v440, %v810
    %812 = vmatprep.mubr.f32.mxu0 0.0
    %813 = vmatmul.mubr.f32.gmra.mrb[0].mxu0 %v504
    %v814 = vpop.f32.mrb[0].mxu0
    %v815 = vadd.f32 %v444, %v814
    %v816 = vpop.f32.mrb[0].mxu0
    %v817 = vadd.f32 %v446, %v816
    %818 = vmatprep.mubr.f32.mxu0 0.0
    %819 = vmatmul.mubr.f32.gmra.mrb[0].mxu0 %v507
    %v820 = vpop.f32.mrb[0].mxu0
    %v821 = vadd.f32 %v450, %v820
    %v822 = vpop.f32.mrb[0].mxu0
    %v823 = vadd.f32 %v452, %v822
    %824 = vmatprep.mubr.f32.mxu0 0.0
    %825 = vmatmul.mubr.f32.gmra.mrb[0].mxu0 %v510
    %v826 = vpop.f32.mrb[0].mxu0
    %v827 = vadd.f32 %v456, %v826
    %v828 = vpop.f32.mrb[0].mxu0
    %v829 = vadd.f32 %v458, %v828
    %830 = vmatprep.mubr.f32.mxu0 0.0
    %831 = vmatmul.mubr.f32.gmra.mrb[0].mxu0 %v513
    %v832 = vpop.f32.mrb[0].mxu0
    %v833 = vadd.f32 %v462, %v832
    %v834 = vpop.f32.mrb[0].mxu0
    %v835 = vadd.f32 %v464, %v834
    %836 = vdwg.mxu0
    %v837 = vld [vmem:[%s4] sm:$0xf]
    %v839 = vlaneseq
    %v840 = vshrl.u32 %v839, 7
    %v841 = vsub.s32 0, %v840
    %v842 = vrot.slane %v837, %v841
    %v843 = vlaneseq
    %v844 = vshrl.u32 %v843, 7
    %v845 = vsub.s32 1, %v844
    %v846 = vrot.slane %v837, %v845
    %v847 = vlaneseq
    %v848 = vshrl.u32 %v847, 7
    %v849 = vsub.s32 2, %v848
    %v850 = vrot.slane %v837, %v849
    %v851 = vlaneseq
    %v852 = vshrl.u32 %v851, 7
    %v853 = vsub.s32 3, %v852
    %v854 = vrot.slane %v837, %v853
    %v859 = vadd.f32 %v582, %v842
    %v860 = vadd.f32 %v584, %v846
    %v861 = vadd.f32 %v743, %v850
    %v862 = vadd.f32 %v745, %v854
    %v863 = vadd.f32 %v588, %v842
    %v864 = vadd.f32 %v590, %v846
    %v865 = vadd.f32 %v749, %v850
    %v866 = vadd.f32 %v751, %v854
    %v867 = vadd.f32 %v594, %v842
    %v868 = vadd.f32 %v596, %v846
    %v869 = vadd.f32 %v755, %v850
    %v870 = vadd.f32 %v757, %v854
    %v871 = vadd.f32 %v600, %v842
    %v872 = vadd.f32 %v602, %v846
    %v873 = vadd.f32 %v761, %v850
    %v874 = vadd.f32 %v763, %v854
    %v875 = vadd.f32 %v606, %v842
    %v876 = vadd.f32 %v608, %v846
    %v877 = vadd.f32 %v767, %v850
    %v878 = vadd.f32 %v769, %v854
    %v879 = vadd.f32 %v612, %v842
    %v880 = vadd.f32 %v614, %v846
    %v881 = vadd.f32 %v773, %v850
    %v882 = vadd.f32 %v775, %v854
    %v883 = vadd.f32 %v618, %v842
    %v884 = vadd.f32 %v620, %v846
    %v885 = vadd.f32 %v779, %v850
    %v886 = vadd.f32 %v781, %v854
    %v887 = vadd.f32 %v624, %v842
    %v888 = vadd.f32 %v626, %v846
    %v889 = vadd.f32 %v785, %v850
    %v890 = vadd.f32 %v787, %v854
    %v891 = vadd.f32 %v630, %v842
    %v892 = vadd.f32 %v632, %v846
    %v893 = vadd.f32 %v791, %v850
    %v894 = vadd.f32 %v793, %v854
    %v895 = vadd.f32 %v636, %v842
    %v896 = vadd.f32 %v638, %v846
    %v897 = vadd.f32 %v797, %v850
    %v898 = vadd.f32 %v799, %v854
    %v899 = vadd.f32 %v642, %v842
    %v900 = vadd.f32 %v644, %v846
    %v901 = vadd.f32 %v803, %v850
    %v902 = vadd.f32 %v805, %v854
    %v903 = vadd.f32 %v648, %v842
    %v904 = vadd.f32 %v650, %v846
    %v905 = vadd.f32 %v809, %v850
    %v906 = vadd.f32 %v811, %v854
    %v907 = vadd.f32 %v654, %v842
    %v908 = vadd.f32 %v656, %v846
    %v909 = vadd.f32 %v815, %v850
    %v910 = vadd.f32 %v817, %v854
    %v911 = vadd.f32 %v660, %v842
    %v912 = vadd.f32 %v662, %v846
    %v913 = vadd.f32 %v821, %v850
    %v914 = vadd.f32 %v823, %v854
    %v915 = vadd.f32 %v666, %v842
    %v916 = vadd.f32 %v668, %v846
    %v917 = vadd.f32 %v827, %v850
    %v918 = vadd.f32 %v829, %v854
    %v919 = vadd.f32 %v672, %v842
    %v920 = vadd.f32 %v674, %v846
    %v921 = vadd.f32 %v833, %v850
    %v922 = vadd.f32 %v835, %v854
    %v923 = vmax.f32 %v859, 0.0
    %v924 = vmax.f32 %v860, 0.0
    %v925 = vmax.f32 %v861, 0.0
    %v926 = vmax.f32 %v862, 0.0
    %v927 = vmax.f32 %v863, 0.0
    %v928 = vmax.f32 %v864, 0.0
    %v929 = vmax.f32 %v865, 0.0
    %v930 = vmax.f32 %v866, 0.0
    %v931 = vmax.f32 %v867, 0.0
    %v932 = vmax.f32 %v868, 0.0
    %v933 = vmax.f32 %v869, 0.0
    %v934 = vmax.f32 %v870, 0.0
    %v935 = vmax.f32 %v871, 0.0
    %v936 = vmax.f32 %v872, 0.0
    %v937 = vmax.f32 %v873, 0.0
    %v938 = vmax.f32 %v874, 0.0
    %v939 = vmax.f32 %v875, 0.0
    %v940 = vmax.f32 %v876, 0.0
    %v941 = vmax.f32 %v877, 0.0
    %v942 = vmax.f32 %v878, 0.0
    %v943 = vmax.f32 %v879, 0.0
    %v944 = vmax.f32 %v880, 0.0
    %v945 = vmax.f32 %v881, 0.0
    %v946 = vmax.f32 %v882, 0.0
    %v947 = vmax.f32 %v883, 0.0
    %v948 = vmax.f32 %v884, 0.0
    %v949 = vmax.f32 %v885, 0.0
    %v950 = vmax.f32 %v886, 0.0
    %v951 = vmax.f32 %v887, 0.0
    %v952 = vmax.f32 %v888, 0.0
    %v953 = vmax.f32 %v889, 0.0
    %v954 = vmax.f32 %v890, 0.0
    %v955 = vmax.f32 %v891, 0.0
    %v956 = vmax.f32 %v892, 0.0
    %v957 = vmax.f32 %v893, 0.0
    %v958 = vmax.f32 %v894, 0.0
    %v959 = vmax.f32 %v895, 0.0
    %v960 = vmax.f32 %v896, 0.0
    %v961 = vmax.f32 %v897, 0.0
    %v962 = vmax.f32 %v898, 0.0
    %v963 = vmax.f32 %v899, 0.0
    %v964 = vmax.f32 %v900, 0.0
    %v965 = vmax.f32 %v901, 0.0
    %v966 = vmax.f32 %v902, 0.0
    %v967 = vmax.f32 %v903, 0.0
    %v968 = vmax.f32 %v904, 0.0
    %v969 = vmax.f32 %v905, 0.0
    %v970 = vmax.f32 %v906, 0.0
    %v971 = vmax.f32 %v907, 0.0
    %v972 = vmax.f32 %v908, 0.0
    %v973 = vmax.f32 %v909, 0.0
    %v974 = vmax.f32 %v910, 0.0
    %v975 = vmax.f32 %v911, 0.0
    %v976 = vmax.f32 %v912, 0.0
    %v977 = vmax.f32 %v913, 0.0
    %v978 = vmax.f32 %v914, 0.0
    %v979 = vmax.f32 %v915, 0.0
    %v980 = vmax.f32 %v916, 0.0
    %v981 = vmax.f32 %v917, 0.0
    %v982 = vmax.f32 %v918, 0.0
    %v983 = vmax.f32 %v919, 0.0
    %v984 = vmax.f32 %v920, 0.0
    %v985 = vmax.f32 %v921, 0.0
    %v986 = vmax.f32 %v922, 0.0
    %v987 = vld [vmem:[#allocation2] sm:$0xff]
    %v988 = vld [vmem:[#allocation2 + $0x8] sm:$0xff]
    %v989 = vld [vmem:[#allocation2 + $0x10] sm:$0xff]
    %v990 = vld [vmem:[#allocation2 + $0x18] sm:$0xff]
    %v991 = vld [vmem:[#allocation2 + $0x20] sm:$0xff]
    %v992 = vld [vmem:[#allocation2 + $0x28] sm:$0xff]
    %v993 = vld [vmem:[#allocation2 + $0x30] sm:$0xff]
    %v994 = vld [vmem:[#allocation2 + $0x38] sm:$0xff]
    %v995 = vld [vmem:[#allocation2 + $0x40] sm:$0xff]
    %v996 = vld [vmem:[#allocation2 + $0x48] sm:$0xff]
    %v997 = vld [vmem:[#allocation2 + $0x50] sm:$0xff]
    %v998 = vld [vmem:[#allocation2 + $0x58] sm:$0xff]
    %v999 = vld [vmem:[#allocation2 + $0x60] sm:$0xff]
    %v1000 = vld [vmem:[#allocation2 + $0x68] sm:$0xff]
    %v1001 = vld [vmem:[#allocation2 + $0x70] sm:$0xff]
    %v1002 = vld [vmem:[#allocation2 + $0x78] sm:$0xff]
    %v1003 = vld [vmem:[#allocation2 + $0x80] sm:$0xff]
    %v1004 = vld [vmem:[#allocation2 + $0x88] sm:$0xff]
    %v1005 = vld [vmem:[#allocation2 + $0x90] sm:$0xff]
    %v1006 = vld [vmem:[#allocation2 + $0x98] sm:$0xff]
    %v1007 = vld [vmem:[#allocation2 + $0xa0] sm:$0xff]
    %v1008 = vld [vmem:[#allocation2 + $0xa8] sm:$0xff]
    %v1009 = vld [vmem:[#allocation2 + $0xb0] sm:$0xff]
    %v1010 = vld [vmem:[#allocation2 + $0xb8] sm:$0xff]
    %v1011 = vld [vmem:[#allocation2 + $0xc0] sm:$0xff]
    %v1012 = vld [vmem:[#allocation2 + $0xc8] sm:$0xff]
    %v1013 = vld [vmem:[#allocation2 + $0xd0] sm:$0xff]
    %v1014 = vld [vmem:[#allocation2 + $0xd8] sm:$0xff]
    %v1015 = vld [vmem:[#allocation2 + $0xe0] sm:$0xff]
    %v1016 = vld [vmem:[#allocation2 + $0xe8] sm:$0xff]
    %v1017 = vld [vmem:[#allocation2 + $0xf0] sm:$0xff]
    %v1018 = vld [vmem:[#allocation2 + $0xf8] sm:$0xff]
    %v1019 = vld [vmem:[#allocation2 + $0x100] sm:$0xff]
    %v1020 = vld [vmem:[#allocation2 + $0x108] sm:$0xff]
    %v1021 = vld [vmem:[#allocation2 + $0x110] sm:$0xff]
    %v1022 = vld [vmem:[#allocation2 + $0x118] sm:$0xff]
    %v1023 = vld [vmem:[#allocation2 + $0x120] sm:$0xff]
    %v1024 = vld [vmem:[#allocation2 + $0x128] sm:$0xff]
    %v1025 = vld [vmem:[#allocation2 + $0x130] sm:$0xff]
    %v1026 = vld [vmem:[#allocation2 + $0x138] sm:$0xff]
    %v1027 = vld [vmem:[#allocation2 + $0x140] sm:$0xff]
    %v1028 = vld [vmem:[#allocation2 + $0x148] sm:$0xff]
    %v1029 = vld [vmem:[#allocation2 + $0x150] sm:$0xff]
    %v1030 = vld [vmem:[#allocation2 + $0x158] sm:$0xff]
    %v1031 = vld [vmem:[#allocation2 + $0x160] sm:$0xff]
    %v1032 = vld [vmem:[#allocation2 + $0x168] sm:$0xff]
    %v1033 = vld [vmem:[#allocation2 + $0x170] sm:$0xff]
    %v1034 = vld [vmem:[#allocation2 + $0x178] sm:$0xff]
    %v1035 = vld [vmem:[#allocation2 + $0x180] sm:$0xff]
    %v1036 = vld [vmem:[#allocation2 + $0x188] sm:$0xff]
    %v1037 = vld [vmem:[#allocation2 + $0x190] sm:$0xff]
    %v1038 = vld [vmem:[#allocation2 + $0x198] sm:$0xff]
    %v1039 = vld [vmem:[#allocation2 + $0x1a0] sm:$0xff]
    %v1040 = vld [vmem:[#allocation2 + $0x1a8] sm:$0xff]
    %v1041 = vld [vmem:[#allocation2 + $0x1b0] sm:$0xff]
    %v1042 = vld [vmem:[#allocation2 + $0x1b8] sm:$0xff]
    %v1043 = vld [vmem:[#allocation2 + $0x1c0] sm:$0xff]
    %v1044 = vld [vmem:[#allocation2 + $0x1c8] sm:$0xff]
    %v1045 = vld [vmem:[#allocation2 + $0x1d0] sm:$0xff]
    %v1046 = vld [vmem:[#allocation2 + $0x1d8] sm:$0xff]
    %v1047 = vld [vmem:[#allocation2 + $0x1e0] sm:$0xff]
    %v1048 = vld [vmem:[#allocation2 + $0x1e8] sm:$0xff]
    %v1049 = vld [vmem:[#allocation2 + $0x1f0] sm:$0xff]
    %v1050 = vld [vmem:[#allocation2 + $0x1f8] sm:$0xff]
    %v1051 = vld [vmem:[#allocation2 + $0x200] sm:$0xff]
    %v1052 = vld [vmem:[#allocation2 + $0x208] sm:$0xff]
    %v1053 = vld [vmem:[#allocation2 + $0x210] sm:$0xff]
    %v1054 = vld [vmem:[#allocation2 + $0x218] sm:$0xff]
    %v1055 = vld [vmem:[#allocation2 + $0x220] sm:$0xff]
    %v1056 = vld [vmem:[#allocation2 + $0x228] sm:$0xff]
    %v1057 = vld [vmem:[#allocation2 + $0x230] sm:$0xff]
    %v1058 = vld [vmem:[#allocation2 + $0x238] sm:$0xff]
    %v1059 = vld [vmem:[#allocation2 + $0x240] sm:$0xff]
    %v1060 = vld [vmem:[#allocation2 + $0x248] sm:$0xff]
    %v1061 = vld [vmem:[#allocation2 + $0x250] sm:$0xff]
    %v1062 = vld [vmem:[#allocation2 + $0x258] sm:$0xff]
    %v1063 = vld [vmem:[#allocation2 + $0x260] sm:$0xff]
    %v1064 = vld [vmem:[#allocation2 + $0x268] sm:$0xff]
    %v1065 = vld [vmem:[#allocation2 + $0x270] sm:$0xff]
    %v1066 = vld [vmem:[#allocation2 + $0x278] sm:$0xff]
    %v1067 = vld [vmem:[#allocation2 + $0x280] sm:$0xff]
    %v1068 = vld [vmem:[#allocation2 + $0x288] sm:$0xff]
    %v1069 = vld [vmem:[#allocation2 + $0x290] sm:$0xff]
    %v1070 = vld [vmem:[#allocation2 + $0x298] sm:$0xff]
    %v1071 = vld [vmem:[#allocation2 + $0x2a0] sm:$0xff]
    %v1072 = vld [vmem:[#allocation2 + $0x2a8] sm:$0xff]
    %v1073 = vld [vmem:[#allocation2 + $0x2b0] sm:$0xff]
    %v1074 = vld [vmem:[#allocation2 + $0x2b8] sm:$0xff]
    %v1075 = vld [vmem:[#allocation2 + $0x2c0] sm:$0xff]
    %v1076 = vld [vmem:[#allocation2 + $0x2c8] sm:$0xff]
    %v1077 = vld [vmem:[#allocation2 + $0x2d0] sm:$0xff]
    %v1078 = vld [vmem:[#allocation2 + $0x2d8] sm:$0xff]
    %v1079 = vld [vmem:[#allocation2 + $0x2e0] sm:$0xff]
    %v1080 = vld [vmem:[#allocation2 + $0x2e8] sm:$0xff]
    %v1081 = vld [vmem:[#allocation2 + $0x2f0] sm:$0xff]
    %v1082 = vld [vmem:[#allocation2 + $0x2f8] sm:$0xff]
    %v1083 = vld [vmem:[#allocation2 + $0x300] sm:$0xff]
    %v1084 = vld [vmem:[#allocation2 + $0x308] sm:$0xff]
    %v1085 = vld [vmem:[#allocation2 + $0x310] sm:$0xff]
    %v1086 = vld [vmem:[#allocation2 + $0x318] sm:$0xff]
    %v1087 = vld [vmem:[#allocation2 + $0x320] sm:$0xff]
    %v1088 = vld [vmem:[#allocation2 + $0x328] sm:$0xff]
    %v1089 = vld [vmem:[#allocation2 + $0x330] sm:$0xff]
    %v1090 = vld [vmem:[#allocation2 + $0x338] sm:$0xff]
    %v1091 = vld [vmem:[#allocation2 + $0x340] sm:$0xff]
    %v1092 = vld [vmem:[#allocation2 + $0x348] sm:$0xff]
    %v1093 = vld [vmem:[#allocation2 + $0x350] sm:$0xff]
    %v1094 = vld [vmem:[#allocation2 + $0x358] sm:$0xff]
    %v1095 = vld [vmem:[#allocation2 + $0x360] sm:$0xff]
    %v1096 = vld [vmem:[#allocation2 + $0x368] sm:$0xff]
    %v1097 = vld [vmem:[#allocation2 + $0x370] sm:$0xff]
    %v1098 = vld [vmem:[#allocation2 + $0x378] sm:$0xff]
    %v1099 = vld [vmem:[#allocation2 + $0x380] sm:$0xff]
    %v1100 = vld [vmem:[#allocation2 + $0x388] sm:$0xff]
    %v1101 = vld [vmem:[#allocation2 + $0x390] sm:$0xff]
    %v1102 = vld [vmem:[#allocation2 + $0x398] sm:$0xff]
    %v1103 = vld [vmem:[#allocation2 + $0x3a0] sm:$0xff]
    %v1104 = vld [vmem:[#allocation2 + $0x3a8] sm:$0xff]
    %v1105 = vld [vmem:[#allocation2 + $0x3b0] sm:$0xff]
    %v1106 = vld [vmem:[#allocation2 + $0x3b8] sm:$0xff]
    %v1107 = vld [vmem:[#allocation2 + $0x3c0] sm:$0xff]
    %v1108 = vld [vmem:[#allocation2 + $0x3c8] sm:$0xff]
    %v1109 = vld [vmem:[#allocation2 + $0x3d0] sm:$0xff]
    %v1110 = vld [vmem:[#allocation2 + $0x3d8] sm:$0xff]
    %v1111 = vld [vmem:[#allocation2 + $0x3e0] sm:$0xff]
    %v1112 = vld [vmem:[#allocation2 + $0x3e8] sm:$0xff]
    %v1113 = vld [vmem:[#allocation2 + $0x3f0] sm:$0xff]
    %v1114 = vld [vmem:[#allocation2 + $0x3f8] sm:$0xff]
    %v1115 = vld [vmem:[#allocation2 + $0x400] sm:$0xff]
    %v1116 = vld [vmem:[#allocation2 + $0x408] sm:$0xff]
    %v1117 = vld [vmem:[#allocation2 + $0x410] sm:$0xff]
    %v1118 = vld [vmem:[#allocation2 + $0x418] sm:$0xff]
    %v1119 = vld [vmem:[#allocation2 + $0x420] sm:$0xff]
    %v1120 = vld [vmem:[#allocation2 + $0x428] sm:$0xff]
    %v1121 = vld [vmem:[#allocation2 + $0x430] sm:$0xff]
    %v1122 = vld [vmem:[#allocation2 + $0x438] sm:$0xff]
    %v1123 = vld [vmem:[#allocation2 + $0x440] sm:$0xff]
    %v1124 = vld [vmem:[#allocation2 + $0x448] sm:$0xff]
    %v1125 = vld [vmem:[#allocation2 + $0x450] sm:$0xff]
    %v1126 = vld [vmem:[#allocation2 + $0x458] sm:$0xff]
    %v1127 = vld [vmem:[#allocation2 + $0x460] sm:$0xff]
    %v1128 = vld [vmem:[#allocation2 + $0x468] sm:$0xff]
    %v1129 = vld [vmem:[#allocation2 + $0x470] sm:$0xff]
    %v1130 = vld [vmem:[#allocation2 + $0x478] sm:$0xff]
    %v1131 = vld [vmem:[#allocation2 + $0x480] sm:$0xff]
    %v1132 = vld [vmem:[#allocation2 + $0x488] sm:$0xff]
    %v1133 = vld [vmem:[#allocation2 + $0x490] sm:$0xff]
    %v1134 = vld [vmem:[#allocation2 + $0x498] sm:$0xff]
    %v1135 = vld [vmem:[#allocation2 + $0x4a0] sm:$0xff]
    %v1136 = vld [vmem:[#allocation2 + $0x4a8] sm:$0xff]
    %v1137 = vld [vmem:[#allocation2 + $0x4b0] sm:$0xff]
    %v1138 = vld [vmem:[#allocation2 + $0x4b8] sm:$0xff]
    %v1139 = vld [vmem:[#allocation2 + $0x4c0] sm:$0xff]
    %v1140 = vld [vmem:[#allocation2 + $0x4c8] sm:$0xff]
    %v1141 = vld [vmem:[#allocation2 + $0x4d0] sm:$0xff]
    %v1142 = vld [vmem:[#allocation2 + $0x4d8] sm:$0xff]
    %v1143 = vld [vmem:[#allocation2 + $0x4e0] sm:$0xff]
    %v1144 = vld [vmem:[#allocation2 + $0x4e8] sm:$0xff]
    %v1145 = vld [vmem:[#allocation2 + $0x4f0] sm:$0xff]
    %v1146 = vld [vmem:[#allocation2 + $0x4f8] sm:$0xff]
    %v1147 = vld [vmem:[#allocation2 + $0x500] sm:$0xff]
    %v1148 = vld [vmem:[#allocation2 + $0x508] sm:$0xff]
    %v1149 = vld [vmem:[#allocation2 + $0x510] sm:$0xff]
    %v1150 = vld [vmem:[#allocation2 + $0x518] sm:$0xff]
    %v1151 = vld [vmem:[#allocation2 + $0x520] sm:$0xff]
    %v1152 = vld [vmem:[#allocation2 + $0x528] sm:$0xff]
    %v1153 = vld [vmem:[#allocation2 + $0x530] sm:$0xff]
    %v1154 = vld [vmem:[#allocation2 + $0x538] sm:$0xff]
    %v1155 = vld [vmem:[#allocation2 + $0x540] sm:$0xff]
    %v1156 = vld [vmem:[#allocation2 + $0x548] sm:$0xff]
    %v1157 = vld [vmem:[#allocation2 + $0x550] sm:$0xff]
    %v1158 = vld [vmem:[#allocation2 + $0x558] sm:$0xff]
    %v1159 = vld [vmem:[#allocation2 + $0x560] sm:$0xff]
    %v1160 = vld [vmem:[#allocation2 + $0x568] sm:$0xff]
    %v1161 = vld [vmem:[#allocation2 + $0x570] sm:$0xff]
    %v1162 = vld [vmem:[#allocation2 + $0x578] sm:$0xff]
    %v1163 = vld [vmem:[#allocation2 + $0x580] sm:$0xff]
    %v1164 = vld [vmem:[#allocation2 + $0x588] sm:$0xff]
    %v1165 = vld [vmem:[#allocation2 + $0x590] sm:$0xff]
    %v1166 = vld [vmem:[#allocation2 + $0x598] sm:$0xff]
    %v1167 = vld [vmem:[#allocation2 + $0x5a0] sm:$0xff]
    %v1168 = vld [vmem:[#allocation2 + $0x5a8] sm:$0xff]
    %v1169 = vld [vmem:[#allocation2 + $0x5b0] sm:$0xff]
    %v1170 = vld [vmem:[#allocation2 + $0x5b8] sm:$0xff]
    %v1171 = vld [vmem:[#allocation2 + $0x5c0] sm:$0xff]
    %v1172 = vld [vmem:[#allocation2 + $0x5c8] sm:$0xff]
    %v1173 = vld [vmem:[#allocation2 + $0x5d0] sm:$0xff]
    %v1174 = vld [vmem:[#allocation2 + $0x5d8] sm:$0xff]
    %v1175 = vld [vmem:[#allocation2 + $0x5e0] sm:$0xff]
    %v1176 = vld [vmem:[#allocation2 + $0x5e8] sm:$0xff]
    %v1177 = vld [vmem:[#allocation2 + $0x5f0] sm:$0xff]
    %v1178 = vld [vmem:[#allocation2 + $0x5f8] sm:$0xff]
    %v1179 = vld [vmem:[#allocation2 + $0x600] sm:$0xff]
    %v1180 = vld [vmem:[#allocation2 + $0x608] sm:$0xff]
    %v1181 = vld [vmem:[#allocation2 + $0x610] sm:$0xff]
    %v1182 = vld [vmem:[#allocation2 + $0x618] sm:$0xff]
    %v1183 = vld [vmem:[#allocation2 + $0x620] sm:$0xff]
    %v1184 = vld [vmem:[#allocation2 + $0x628] sm:$0xff]
    %v1185 = vld [vmem:[#allocation2 + $0x630] sm:$0xff]
    %v1186 = vld [vmem:[#allocation2 + $0x638] sm:$0xff]
    %v1187 = vld [vmem:[#allocation2 + $0x640] sm:$0xff]
    %v1188 = vld [vmem:[#allocation2 + $0x648] sm:$0xff]
    %v1189 = vld [vmem:[#allocation2 + $0x650] sm:$0xff]
    %v1190 = vld [vmem:[#allocation2 + $0x658] sm:$0xff]
    %v1191 = vld [vmem:[#allocation2 + $0x660] sm:$0xff]
    %v1192 = vld [vmem:[#allocation2 + $0x668] sm:$0xff]
    %v1193 = vld [vmem:[#allocation2 + $0x670] sm:$0xff]
    %v1194 = vld [vmem:[#allocation2 + $0x678] sm:$0xff]
    %v1195 = vld [vmem:[#allocation2 + $0x680] sm:$0xff]
    %v1196 = vld [vmem:[#allocation2 + $0x688] sm:$0xff]
    %v1197 = vld [vmem:[#allocation2 + $0x690] sm:$0xff]
    %v1198 = vld [vmem:[#allocation2 + $0x698] sm:$0xff]
    %v1199 = vld [vmem:[#allocation2 + $0x6a0] sm:$0xff]
    %v1200 = vld [vmem:[#allocation2 + $0x6a8] sm:$0xff]
    %v1201 = vld [vmem:[#allocation2 + $0x6b0] sm:$0xff]
    %v1202 = vld [vmem:[#allocation2 + $0x6b8] sm:$0xff]
    %v1203 = vld [vmem:[#allocation2 + $0x6c0] sm:$0xff]
    %v1204 = vld [vmem:[#allocation2 + $0x6c8] sm:$0xff]
    %v1205 = vld [vmem:[#allocation2 + $0x6d0] sm:$0xff]
    %v1206 = vld [vmem:[#allocation2 + $0x6d8] sm:$0xff]
    %v1207 = vld [vmem:[#allocation2 + $0x6e0] sm:$0xff]
    %v1208 = vld [vmem:[#allocation2 + $0x6e8] sm:$0xff]
    %v1209 = vld [vmem:[#allocation2 + $0x6f0] sm:$0xff]
    %v1210 = vld [vmem:[#allocation2 + $0x6f8] sm:$0xff]
    %v1211 = vld [vmem:[#allocation2 + $0x700] sm:$0xff]
    %v1212 = vld [vmem:[#allocation2 + $0x708] sm:$0xff]
    %v1213 = vld [vmem:[#allocation2 + $0x710] sm:$0xff]
    %v1214 = vld [vmem:[#allocation2 + $0x718] sm:$0xff]
    %v1215 = vld [vmem:[#allocation2 + $0x720] sm:$0xff]
    %v1216 = vld [vmem:[#allocation2 + $0x728] sm:$0xff]
    %v1217 = vld [vmem:[#allocation2 + $0x730] sm:$0xff]
    %v1218 = vld [vmem:[#allocation2 + $0x738] sm:$0xff]
    %v1219 = vld [vmem:[#allocation2 + $0x740] sm:$0xff]
    %v1220 = vld [vmem:[#allocation2 + $0x748] sm:$0xff]
    %v1221 = vld [vmem:[#allocation2 + $0x750] sm:$0xff]
    %v1222 = vld [vmem:[#allocation2 + $0x758] sm:$0xff]
    %v1223 = vld [vmem:[#allocation2 + $0x760] sm:$0xff]
    %v1224 = vld [vmem:[#allocation2 + $0x768] sm:$0xff]
    %v1225 = vld [vmem:[#allocation2 + $0x770] sm:$0xff]
    %v1226 = vld [vmem:[#allocation2 + $0x778] sm:$0xff]
    %v1227 = vld [vmem:[#allocation2 + $0x780] sm:$0xff]
    %v1228 = vld [vmem:[#allocation2 + $0x788] sm:$0xff]
    %v1229 = vld [vmem:[#allocation2 + $0x790] sm:$0xff]
    %v1230 = vld [vmem:[#allocation2 + $0x798] sm:$0xff]
    %v1231 = vld [vmem:[#allocation2 + $0x7a0] sm:$0xff]
    %v1232 = vld [vmem:[#allocation2 + $0x7a8] sm:$0xff]
    %v1233 = vld [vmem:[#allocation2 + $0x7b0] sm:$0xff]
    %v1234 = vld [vmem:[#allocation2 + $0x7b8] sm:$0xff]
    %v1235 = vld [vmem:[#allocation2 + $0x7c0] sm:$0xff]
    %v1236 = vld [vmem:[#allocation2 + $0x7c8] sm:$0xff]
    %v1237 = vld [vmem:[#allocation2 + $0x7d0] sm:$0xff]
    %v1238 = vld [vmem:[#allocation2 + $0x7d8] sm:$0xff]
    %v1239 = vld [vmem:[#allocation2 + $0x7e0] sm:$0xff]
    %v1240 = vld [vmem:[#allocation2 + $0x7e8] sm:$0xff]
    %v1241 = vld [vmem:[#allocation2 + $0x7f0] sm:$0xff]
    %v1242 = vld [vmem:[#allocation2 + $0x7f8] sm:$0xff]
    %v1243 = vld [vmem:[%s6] sm:$0xf]
    %v1245 = vlaneseq
    %v1246 = vshrl.u32 %v1245, 7
    %v1247 = vsub.s32 0, %v1246
    %v1248 = vrot.slane %v1243, %v1247
    %v1249 = vlaneseq
    %v1250 = vshrl.u32 %v1249, 7
    %v1251 = vsub.s32 1, %v1250
    %v1252 = vrot.slane %v1243, %v1251
    %v1253 = vlaneseq
    %v1254 = vshrl.u32 %v1253, 7
    %v1255 = vsub.s32 2, %v1254
    %v1256 = vrot.slane %v1243, %v1255
    %v1257 = vlaneseq
    %v1258 = vshrl.u32 %v1257, 7
    %v1259 = vsub.s32 3, %v1258
    %v1260 = vrot.slane %v1243, %v1259
    %1265 = vmatprep.subr.mxu0 %v988
    %1266 = vmatpush1.msra.mxu0 %v987
    %1267 = vmatprep.subr.mxu0 %v992
    %1268 = vmatpush1.msra.mxu0 %v991
    %1269 = vmatprep.subr.mxu0 %v996
    %1270 = vmatpush1.msra.mxu0 %v995
    %1271 = vmatprep.subr.mxu0 %v1000
    %1272 = vmatpush1.msra.mxu0 %v999
    %1273 = vmatprep.subr.mxu0 %v1004
    %1274 = vmatpush1.msra.mxu0 %v1003
    %1275 = vmatprep.subr.mxu0 %v1008
    %1276 = vmatpush1.msra.mxu0 %v1007
    %1277 = vmatprep.subr.mxu0 %v1012
    %1278 = vmatpush1.msra.mxu0 %v1011
    %1279 = vmatprep.subr.mxu0 %v1016
    %1280 = vmatpush1.msra.mxu0 %v1015
    %1281 = vmatprep.subr.mxu0 %v1020
    %1282 = vmatpush1.msra.mxu0 %v1019
    %1283 = vmatprep.subr.mxu0 %v1024
    %1284 = vmatpush1.msra.mxu0 %v1023
    %1285 = vmatprep.subr.mxu0 %v1028
    %1286 = vmatpush1.msra.mxu0 %v1027
    %1287 = vmatprep.subr.mxu0 %v1032
    %1288 = vmatpush1.msra.mxu0 %v1031
    %1289 = vmatprep.subr.mxu0 %v1036
    %1290 = vmatpush1.msra.mxu0 %v1035
    %1291 = vmatprep.subr.mxu0 %v1040
    %1292 = vmatpush1.msra.mxu0 %v1039
    %1293 = vmatprep.subr.mxu0 %v1044
    %1294 = vmatpush1.msra.mxu0 %v1043
    %1295 = vmatprep.subr.mxu0 %v1048
    %1296 = vmatpush1.msra.mxu0 %v1047
    %1297 = vmatprep.subr.mxu0 %v1052
    %1298 = vmatpush1.msra.mxu0 %v1051
    %1299 = vmatprep.subr.mxu0 %v1056
    %1300 = vmatpush1.msra.mxu0 %v1055
    %1301 = vmatprep.subr.mxu0 %v1060
    %1302 = vmatpush1.msra.mxu0 %v1059
    %1303 = vmatprep.subr.mxu0 %v1064
    %1304 = vmatpush1.msra.mxu0 %v1063
    %1305 = vmatprep.subr.mxu0 %v1068
    %1306 = vmatpush1.msra.mxu0 %v1067
    %1307 = vmatprep.subr.mxu0 %v1072
    %1308 = vmatpush1.msra.mxu0 %v1071
    %1309 = vmatprep.subr.mxu0 %v1076
    %1310 = vmatpush1.msra.mxu0 %v1075
    %1311 = vmatprep.subr.mxu0 %v1080
    %1312 = vmatpush1.msra.mxu0 %v1079
    %1313 = vmatprep.subr.mxu0 %v1084
    %1314 = vmatpush1.msra.mxu0 %v1083
    %1315 = vmatprep.subr.mxu0 %v1088
    %1316 = vmatpush1.msra.mxu0 %v1087
    %1317 = vmatprep.subr.mxu0 %v1092
    %1318 = vmatpush1.msra.mxu0 %v1091
    %1319 = vmatprep.subr.mxu0 %v1096
    %1320 = vmatpush1.msra.mxu0 %v1095
    %1321 = vmatprep.subr.mxu0 %v1100
    %1322 = vmatpush1.msra.mxu0 %v1099
    %1323 = vmatprep.subr.mxu0 %v1104
    %1324 = vmatpush1.msra.mxu0 %v1103
    %1325 = vmatprep.subr.mxu0 %v1108
    %1326 = vmatpush1.msra.mxu0 %v1107
    %1327 = vmatprep.subr.mxu0 %v1112
    %1328 = vmatpush1.msra.mxu0 %v1111
    %1329 = vmatprep.mubr.f32.mxu0 %v924
    %1330 = vmatmul.mubr.f32.gmra.mrb[0].mxu0 %v923
    %v1331 = vpop.f32.mrb[0].mxu0
    %v1332 = vadd.f32 %v1248, %v1331
    %v1333 = vpop.f32.mrb[0].mxu0
    %v1334 = vadd.f32 %v1252, %v1333
    %1335 = vmatprep.mubr.f32.mxu0 %v928
    %1336 = vmatmul.mubr.f32.gmra.mrb[0].mxu0 %v927
    %v1337 = vpop.f32.mrb[0].mxu0
    %v1338 = vadd.f32 %v1248, %v1337
    %v1339 = vpop.f32.mrb[0].mxu0
    %v1340 = vadd.f32 %v1252, %v1339
    %1341 = vmatprep.mubr.f32.mxu0 %v932
    %1342 = vmatmul.mubr.f32.gmra.mrb[0].mxu0 %v931
    %v1343 = vpop.f32.mrb[0].mxu0
    %v1344 = vadd.f32 %v1248, %v1343
    %v1345 = vpop.f32.mrb[0].mxu0
    %v1346 = vadd.f32 %v1252, %v1345
    %1347 = vmatprep.mubr.f32.mxu0 %v936
    %1348 = vmatmul.mubr.f32.gmra.mrb[0].mxu0 %v935
    %v1349 = vpop.f32.mrb[0].mxu0
    %v1350 = vadd.f32 %v1248, %v1349
    %v1351 = vpop.f32.mrb[0].mxu0
    %v1352 = vadd.f32 %v1252, %v1351
    %1353 = vmatprep.mubr.f32.mxu0 %v940
    %1354 = vmatmul.mubr.f32.gmra.mrb[0].mxu0 %v939
    %v1355 = vpop.f32.mrb[0].mxu0
    %v1356 = vadd.f32 %v1248, %v1355
    %v1357 = vpop.f32.mrb[0].mxu0
    %v1358 = vadd.f32 %v1252, %v1357
    %1359 = vmatprep.mubr.f32.mxu0 %v944
    %1360 = vmatmul.mubr.f32.gmra.mrb[0].mxu0 %v943
    %v1361 = vpop.f32.mrb[0].mxu0
    %v1362 = vadd.f32 %v1248, %v1361
    %v1363 = vpop.f32.mrb[0].mxu0
    %v1364 = vadd.f32 %v1252, %v1363
    %1365 = vmatprep.mubr.f32.mxu0 %v948
    %1366 = vmatmul.mubr.f32.gmra.mrb[0].mxu0 %v947
    %v1367 = vpop.f32.mrb[0].mxu0
    %v1368 = vadd.f32 %v1248, %v1367
    %v1369 = vpop.f32.mrb[0].mxu0
    %v1370 = vadd.f32 %v1252, %v1369
    %1371 = vmatprep.mubr.f32.mxu0 %v952
    %1372 = vmatmul.mubr.f32.gmra.mrb[0].mxu0 %v951
    %v1373 = vpop.f32.mrb[0].mxu0
    %v1374 = vadd.f32 %v1248, %v1373
    %v1375 = vpop.f32.mrb[0].mxu0
    %v1376 = vadd.f32 %v1252, %v1375
    %1377 = vmatprep.mubr.f32.mxu0 %v956
    %1378 = vmatmul.mubr.f32.gmra.mrb[0].mxu0 %v955
    %v1379 = vpop.f32.mrb[0].mxu0
    %v1380 = vadd.f32 %v1248, %v1379
    %v1381 = vpop.f32.mrb[0].mxu0
    %v1382 = vadd.f32 %v1252, %v1381
    %1383 = vmatprep.mubr.f32.mxu0 %v960
    %1384 = vmatmul.mubr.f32.gmra.mrb[0].mxu0 %v959
    %v1385 = vpop.f32.mrb[0].mxu0
    %v1386 = vadd.f32 %v1248, %v1385
    %v1387 = vpop.f32.mrb[0].mxu0
    %v1388 = vadd.f32 %v1252, %v1387
    %1389 = vmatprep.mubr.f32.mxu0 %v964
    %1390 = vmatmul.mubr.f32.gmra.mrb[0].mxu0 %v963
    %v1391 = vpop.f32.mrb[0].mxu0
    %v1392 = vadd.f32 %v1248, %v1391
    %v1393 = vpop.f32.mrb[0].mxu0
    %v1394 = vadd.f32 %v1252, %v1393
    %1395 = vmatprep.mubr.f32.mxu0 %v968
    %1396 = vmatmul.mubr.f32.gmra.mrb[0].mxu0 %v967
    %v1397 = vpop.f32.mrb[0].mxu0
    %v1398 = vadd.f32 %v1248, %v1397
    %v1399 = vpop.f32.mrb[0].mxu0
    %v1400 = vadd.f32 %v1252, %v1399
    %1401 = vmatprep.mubr.f32.mxu0 %v972
    %1402 = vmatmul.mubr.f32.gmra.mrb[0].mxu0 %v971
    %v1403 = vpop.f32.mrb[0].mxu0
    %v1404 = vadd.f32 %v1248, %v1403
    %v1405 = vpop.f32.mrb[0].mxu0
    %v1406 = vadd.f32 %v1252, %v1405
    %1407 = vmatprep.mubr.f32.mxu0 %v976
    %1408 = vmatmul.mubr.f32.gmra.mrb[0].mxu0 %v975
    %v1409 = vpop.f32.mrb[0].mxu0
    %v1410 = vadd.f32 %v1248, %v1409
    %v1411 = vpop.f32.mrb[0].mxu0
    %v1412 = vadd.f32 %v1252, %v1411
    %1413 = vmatprep.mubr.f32.mxu0 %v980
    %1414 = vmatmul.mubr.f32.gmra.mrb[0].mxu0 %v979
    %v1415 = vpop.f32.mrb[0].mxu0
    %v1416 = vadd.f32 %v1248, %v1415
    %v1417 = vpop.f32.mrb[0].mxu0
    %v1418 = vadd.f32 %v1252, %v1417
    %1419 = vmatprep.mubr.f32.mxu0 %v984
    %1420 = vmatmul.mubr.f32.gmra.mrb[0].mxu0 %v983
    %v1421 = vpop.f32.mrb[0].mxu0
    %v1422 = vadd.f32 %v1248, %v1421
    %v1423 = vpop.f32.mrb[0].mxu0
    %v1424 = vadd.f32 %v1252, %v1423
    %1425 = vdwg.mxu0
    %1426 = vmatprep.subr.mxu0 %v1116
    %1427 = vmatpush1.msra.mxu0 %v1115
    %1428 = vmatprep.subr.mxu0 %v1120
    %1429 = vmatpush1.msra.mxu0 %v1119
    %1430 = vmatprep.subr.mxu0 %v1124
    %1431 = vmatpush1.msra.mxu0 %v1123
    %1432 = vmatprep.subr.mxu0 %v1128
    %1433 = vmatpush1.msra.mxu0 %v1127
    %1434 = vmatprep.subr.mxu0 %v1132
    %1435 = vmatpush1.msra.mxu0 %v1131
    %1436 = vmatprep.subr.mxu0 %v1136
    %1437 = vmatpush1.msra.mxu0 %v1135
    %1438 = vmatprep.subr.mxu0 %v1140
    %1439 = vmatpush1.msra.mxu0 %v1139
    %1440 = vmatprep.subr.mxu0 %v1144
    %1441 = vmatpush1.msra.mxu0 %v1143
    %1442 = vmatprep.subr.mxu0 %v1148
    %1443 = vmatpush1.msra.mxu0 %v1147
    %1444 = vmatprep.subr.mxu0 %v1152
    %1445 = vmatpush1.msra.mxu0 %v1151
    %1446 = vmatprep.subr.mxu0 %v1156
    %1447 = vmatpush1.msra.mxu0 %v1155
    %1448 = vmatprep.subr.mxu0 %v1160
    %1449 = vmatpush1.msra.mxu0 %v1159
    %1450 = vmatprep.subr.mxu0 %v1164
    %1451 = vmatpush1.msra.mxu0 %v1163
    %1452 = vmatprep.subr.mxu0 %v1168
    %1453 = vmatpush1.msra.mxu0 %v1167
    %1454 = vmatprep.subr.mxu0 %v1172
    %1455 = vmatpush1.msra.mxu0 %v1171
    %1456 = vmatprep.subr.mxu0 %v1176
    %1457 = vmatpush1.msra.mxu0 %v1175
    %1458 = vmatprep.subr.mxu0 %v1180
    %1459 = vmatpush1.msra.mxu0 %v1179
    %1460 = vmatprep.subr.mxu0 %v1184
    %1461 = vmatpush1.msra.mxu0 %v1183
    %1462 = vmatprep.subr.mxu0 %v1188
    %1463 = vmatpush1.msra.mxu0 %v1187
    %1464 = vmatprep.subr.mxu0 %v1192
    %1465 = vmatpush1.msra.mxu0 %v1191
    %1466 = vmatprep.subr.mxu0 %v1196
    %1467 = vmatpush1.msra.mxu0 %v1195
    %1468 = vmatprep.subr.mxu0 %v1200
    %1469 = vmatpush1.msra.mxu0 %v1199
    %1470 = vmatprep.subr.mxu0 %v1204
    %1471 = vmatpush1.msra.mxu0 %v1203
    %1472 = vmatprep.subr.mxu0 %v1208
    %1473 = vmatpush1.msra.mxu0 %v1207
    %1474 = vmatprep.subr.mxu0 %v1212
    %1475 = vmatpush1.msra.mxu0 %v1211
    %1476 = vmatprep.subr.mxu0 %v1216
    %1477 = vmatpush1.msra.mxu0 %v1215
    %1478 = vmatprep.subr.mxu0 %v1220
    %1479 = vmatpush1.msra.mxu0 %v1219
    %1480 = vmatprep.subr.mxu0 %v1224
    %1481 = vmatpush1.msra.mxu0 %v1223
    %1482 = vmatprep.subr.mxu0 %v1228
    %1483 = vmatpush1.msra.mxu0 %v1227
    %1484 = vmatprep.subr.mxu0 %v1232
    %1485 = vmatpush1.msra.mxu0 %v1231
    %1486 = vmatprep.subr.mxu0 %v1236
    %1487 = vmatpush1.msra.mxu0 %v1235
    %1488 = vmatprep.subr.mxu0 %v1240
    %1489 = vmatpush1.msra.mxu0 %v1239
    %1490 = vmatprep.mubr.f32.mxu0 %v926
    %1491 = vmatmul.mubr.f32.gmra.mrb[0].mxu0 %v925
    %v1492 = vpop.f32.mrb[0].mxu0
    %v1493 = vadd.f32 %v1332, %v1492
    %v1494 = vpop.f32.mrb[0].mxu0
    %v1495 = vadd.f32 %v1334, %v1494
    %1496 = vmatprep.mubr.f32.mxu0 %v930
    %1497 = vmatmul.mubr.f32.gmra.mrb[0].mxu0 %v929
    %v1498 = vpop.f32.mrb[0].mxu0
    %v1499 = vadd.f32 %v1338, %v1498
    %v1500 = vpop.f32.mrb[0].mxu0
    %v1501 = vadd.f32 %v1340, %v1500
    %1502 = vmatprep.mubr.f32.mxu0 %v934
    %1503 = vmatmul.mubr.f32.gmra.mrb[0].mxu0 %v933
    %v1504 = vpop.f32.mrb[0].mxu0
    %v1505 = vadd.f32 %v1344, %v1504
    %v1506 = vpop.f32.mrb[0].mxu0
    %v1507 = vadd.f32 %v1346, %v1506
    %1508 = vmatprep.mubr.f32.mxu0 %v938
    %1509 = vmatmul.mubr.f32.gmra.mrb[0].mxu0 %v937
    %v1510 = vpop.f32.mrb[0].mxu0
    %v1511 = vadd.f32 %v1350, %v1510
    %v1512 = vpop.f32.mrb[0].mxu0
    %v1513 = vadd.f32 %v1352, %v1512
    %1514 = vmatprep.mubr.f32.mxu0 %v942
    %1515 = vmatmul.mubr.f32.gmra.mrb[0].mxu0 %v941
    %v1516 = vpop.f32.mrb[0].mxu0
    %v1517 = vadd.f32 %v1356, %v1516
    %v1518 = vpop.f32.mrb[0].mxu0
    %v1519 = vadd.f32 %v1358, %v1518
    %1520 = vmatprep.mubr.f32.mxu0 %v946
    %1521 = vmatmul.mubr.f32.gmra.mrb[0].mxu0 %v945
    %v1522 = vpop.f32.mrb[0].mxu0
    %v1523 = vadd.f32 %v1362, %v1522
    %v1524 = vpop.f32.mrb[0].mxu0
    %v1525 = vadd.f32 %v1364, %v1524
    %1526 = vmatprep.mubr.f32.mxu0 %v950
    %1527 = vmatmul.mubr.f32.gmra.mrb[0].mxu0 %v949
    %v1528 = vpop.f32.mrb[0].mxu0
    %v1529 = vadd.f32 %v1368, %v1528
    %v1530 = vpop.f32.mrb[0].mxu0
    %v1531 = vadd.f32 %v1370, %v1530
    %1532 = vmatprep.mubr.f32.mxu0 %v954
    %1533 = vmatmul.mubr.f32.gmra.mrb[0].mxu0 %v953
    %v1534 = vpop.f32.mrb[0].mxu0
    %v1535 = vadd.f32 %v1374, %v1534
    %v1536 = vpop.f32.mrb[0].mxu0
    %v1537 = vadd.f32 %v1376, %v1536
    %1538 = vmatprep.mubr.f32.mxu0 %v958
    %1539 = vmatmul.mubr.f32.gmra.mrb[0].mxu0 %v957
    %v1540 = vpop.f32.mrb[0].mxu0
    %v1541 = vadd.f32 %v1380, %v1540
    %v1542 = vpop.f32.mrb[0].mxu0
    %v1543 = vadd.f32 %v1382, %v1542
    %1544 = vmatprep.mubr.f32.mxu0 %v962
    %1545 = vmatmul.mubr.f32.gmra.mrb[0].mxu0 %v961
    %v1546 = vpop.f32.mrb[0].mxu0
    %v1547 = vadd.f32 %v1386, %v1546
    %v1548 = vpop.f32.mrb[0].mxu0
    %v1549 = vadd.f32 %v1388, %v1548
    %1550 = vmatprep.mubr.f32.mxu0 %v966
    %1551 = vmatmul.mubr.f32.gmra.mrb[0].mxu0 %v965
    %v1552 = vpop.f32.mrb[0].mxu0
    %v1553 = vadd.f32 %v1392, %v1552
    %v1554 = vpop.f32.mrb[0].mxu0
    %v1555 = vadd.f32 %v1394, %v1554
    %1556 = vmatprep.mubr.f32.mxu0 %v970
    %1557 = vmatmul.mubr.f32.gmra.mrb[0].mxu0 %v969
    %v1558 = vpop.f32.mrb[0].mxu0
    %v1559 = vadd.f32 %v1398, %v1558
    %v1560 = vpop.f32.mrb[0].mxu0
    %v1561 = vadd.f32 %v1400, %v1560
    %1562 = vmatprep.mubr.f32.mxu0 %v974
    %1563 = vmatmul.mubr.f32.gmra.mrb[0].mxu0 %v973
    %v1564 = vpop.f32.mrb[0].mxu0
    %v1565 = vadd.f32 %v1404, %v1564
    %v1566 = vpop.f32.mrb[0].mxu0
    %v1567 = vadd.f32 %v1406, %v1566
    %1568 = vmatprep.mubr.f32.mxu0 %v978
    %1569 = vmatmul.mubr.f32.gmra.mrb[0].mxu0 %v977
    %v1570 = vpop.f32.mrb[0].mxu0
    %v1571 = vadd.f32 %v1410, %v1570
    %v1572 = vpop.f32.mrb[0].mxu0
    %v1573 = vadd.f32 %v1412, %v1572
    %1574 = vmatprep.mubr.f32.mxu0 %v982
    %1575 = vmatmul.mubr.f32.gmra.mrb[0].mxu0 %v981
    %v1576 = vpop.f32.mrb[0].mxu0
    %v1577 = vadd.f32 %v1416, %v1576
    %v1578 = vpop.f32.mrb[0].mxu0
    %v1579 = vadd.f32 %v1418, %v1578
    %1580 = vmatprep.mubr.f32.mxu0 %v986
    %1581 = vmatmul.mubr.f32.gmra.mrb[0].mxu0 %v985
    %v1582 = vpop.f32.mrb[0].mxu0
    %v1583 = vadd.f32 %v1422, %v1582
    %v1584 = vpop.f32.mrb[0].mxu0
    %v1585 = vadd.f32 %v1424, %v1584
    %1586 = vdwg.mxu0
    %1587 = vmatprep.subr.mxu0 %v990
    %1588 = vmatpush1.msra.mxu0 %v989
    %1589 = vmatprep.subr.mxu0 %v994
    %1590 = vmatpush1.msra.mxu0 %v993
    %1591 = vmatprep.subr.mxu0 %v998
    %1592 = vmatpush1.msra.mxu0 %v997
    %1593 = vmatprep.subr.mxu0 %v1002
    %1594 = vmatpush1.msra.mxu0 %v1001
    %1595 = vmatprep.subr.mxu0 %v1006
    %1596 = vmatpush1.msra.mxu0 %v1005
    %1597 = vmatprep.subr.mxu0 %v1010
    %1598 = vmatpush1.msra.mxu0 %v1009
    %1599 = vmatprep.subr.mxu0 %v1014
    %1600 = vmatpush1.msra.mxu0 %v1013
    %1601 = vmatprep.subr.mxu0 %v1018
    %1602 = vmatpush1.msra.mxu0 %v1017
    %1603 = vmatprep.subr.mxu0 %v1022
    %1604 = vmatpush1.msra.mxu0 %v1021
    %1605 = vmatprep.subr.mxu0 %v1026
    %1606 = vmatpush1.msra.mxu0 %v1025
    %1607 = vmatprep.subr.mxu0 %v1030
    %1608 = vmatpush1.msra.mxu0 %v1029
    %1609 = vmatprep.subr.mxu0 %v1034
    %1610 = vmatpush1.msra.mxu0 %v1033
    %1611 = vmatprep.subr.mxu0 %v1038
    %1612 = vmatpush1.msra.mxu0 %v1037
    %1613 = vmatprep.subr.mxu0 %v1042
    %1614 = vmatpush1.msra.mxu0 %v1041
    %1615 = vmatprep.subr.mxu0 %v1046
    %1616 = vmatpush1.msra.mxu0 %v1045
    %1617 = vmatprep.subr.mxu0 %v1050
    %1618 = vmatpush1.msra.mxu0 %v1049
    %1619 = vmatprep.subr.mxu0 %v1054
    %1620 = vmatpush1.msra.mxu0 %v1053
    %1621 = vmatprep.subr.mxu0 %v1058
    %1622 = vmatpush1.msra.mxu0 %v1057
    %1623 = vmatprep.subr.mxu0 %v1062
    %1624 = vmatpush1.msra.mxu0 %v1061
    %1625 = vmatprep.subr.mxu0 %v1066
    %1626 = vmatpush1.msra.mxu0 %v1065
    %1627 = vmatprep.subr.mxu0 %v1070
    %1628 = vmatpush1.msra.mxu0 %v1069
    %1629 = vmatprep.subr.mxu0 %v1074
    %1630 = vmatpush1.msra.mxu0 %v1073
    %1631 = vmatprep.subr.mxu0 %v1078
    %1632 = vmatpush1.msra.mxu0 %v1077
    %1633 = vmatprep.subr.mxu0 %v1082
    %1634 = vmatpush1.msra.mxu0 %v1081
    %1635 = vmatprep.subr.mxu0 %v1086
    %1636 = vmatpush1.msra.mxu0 %v1085
    %1637 = vmatprep.subr.mxu0 %v1090
    %1638 = vmatpush1.msra.mxu0 %v1089
    %1639 = vmatprep.subr.mxu0 %v1094
    %1640 = vmatpush1.msra.mxu0 %v1093
    %1641 = vmatprep.subr.mxu0 %v1098
    %1642 = vmatpush1.msra.mxu0 %v1097
    %1643 = vmatprep.subr.mxu0 %v1102
    %1644 = vmatpush1.msra.mxu0 %v1101
    %1645 = vmatprep.subr.mxu0 %v1106
    %1646 = vmatpush1.msra.mxu0 %v1105
    %1647 = vmatprep.subr.mxu0 %v1110
    %1648 = vmatpush1.msra.mxu0 %v1109
    %1649 = vmatprep.subr.mxu0 %v1114
    %1650 = vmatpush1.msra.mxu0 %v1113
    %1651 = vmatprep.mubr.f32.mxu0 %v924
    %1652 = vmatmul.mubr.f32.gmra.mrb[0].mxu0 %v923
    %v1653 = vpop.f32.mrb[0].mxu0
    %v1654 = vadd.f32 %v1256, %v1653
    %v1655 = vpop.f32.mrb[0].mxu0
    %v1656 = vadd.f32 %v1260, %v1655
    %1657 = vmatprep.mubr.f32.mxu0 %v928
    %1658 = vmatmul.mubr.f32.gmra.mrb[0].mxu0 %v927
    %v1659 = vpop.f32.mrb[0].mxu0
    %v1660 = vadd.f32 %v1256, %v1659
    %v1661 = vpop.f32.mrb[0].mxu0
    %v1662 = vadd.f32 %v1260, %v1661
    %1663 = vmatprep.mubr.f32.mxu0 %v932
    %1664 = vmatmul.mubr.f32.gmra.mrb[0].mxu0 %v931
    %v1665 = vpop.f32.mrb[0].mxu0
    %v1666 = vadd.f32 %v1256, %v1665
    %v1667 = vpop.f32.mrb[0].mxu0
    %v1668 = vadd.f32 %v1260, %v1667
    %1669 = vmatprep.mubr.f32.mxu0 %v936
    %1670 = vmatmul.mubr.f32.gmra.mrb[0].mxu0 %v935
    %v1671 = vpop.f32.mrb[0].mxu0
    %v1672 = vadd.f32 %v1256, %v1671
    %v1673 = vpop.f32.mrb[0].mxu0
    %v1674 = vadd.f32 %v1260, %v1673
    %1675 = vmatprep.mubr.f32.mxu0 %v940
    %1676 = vmatmul.mubr.f32.gmra.mrb[0].mxu0 %v939
    %v1677 = vpop.f32.mrb[0].mxu0
    %v1678 = vadd.f32 %v1256, %v1677
    %v1679 = vpop.f32.mrb[0].mxu0
    %v1680 = vadd.f32 %v1260, %v1679
    %1681 = vmatprep.mubr.f32.mxu0 %v944
    %1682 = vmatmul.mubr.f32.gmra.mrb[0].mxu0 %v943
    %v1683 = vpop.f32.mrb[0].mxu0
    %v1684 = vadd.f32 %v1256, %v1683
    %v1685 = vpop.f32.mrb[0].mxu0
    %v1686 = vadd.f32 %v1260, %v1685
    %1687 = vmatprep.mubr.f32.mxu0 %v948
    %1688 = vmatmul.mubr.f32.gmra.mrb[0].mxu0 %v947
    %v1689 = vpop.f32.mrb[0].mxu0
    %v1690 = vadd.f32 %v1256, %v1689
    %v1691 = vpop.f32.mrb[0].mxu0
    %v1692 = vadd.f32 %v1260, %v1691
    %1693 = vmatprep.mubr.f32.mxu0 %v952
    %1694 = vmatmul.mubr.f32.gmra.mrb[0].mxu0 %v951
    %v1695 = vpop.f32.mrb[0].mxu0
    %v1696 = vadd.f32 %v1256, %v1695
    %v1697 = vpop.f32.mrb[0].mxu0
    %v1698 = vadd.f32 %v1260, %v1697
    %1699 = vmatprep.mubr.f32.mxu0 %v956
    %1700 = vmatmul.mubr.f32.gmra.mrb[0].mxu0 %v955
    %v1701 = vpop.f32.mrb[0].mxu0
    %v1702 = vadd.f32 %v1256, %v1701
    %v1703 = vpop.f32.mrb[0].mxu0
    %v1704 = vadd.f32 %v1260, %v1703
    %1705 = vmatprep.mubr.f32.mxu0 %v960
    %1706 = vmatmul.mubr.f32.gmra.mrb[0].mxu0 %v959
    %v1707 = vpop.f32.mrb[0].mxu0
    %v1708 = vadd.f32 %v1256, %v1707
    %v1709 = vpop.f32.mrb[0].mxu0
    %v1710 = vadd.f32 %v1260, %v1709
    %1711 = vmatprep.mubr.f32.mxu0 %v964
    %1712 = vmatmul.mubr.f32.gmra.mrb[0].mxu0 %v963
    %v1713 = vpop.f32.mrb[0].mxu0
    %v1714 = vadd.f32 %v1256, %v1713
    %v1715 = vpop.f32.mrb[0].mxu0
    %v1716 = vadd.f32 %v1260, %v1715
    %1717 = vmatprep.mubr.f32.mxu0 %v968
    %1718 = vmatmul.mubr.f32.gmra.mrb[0].mxu0 %v967
    %v1719 = vpop.f32.mrb[0].mxu0
    %v1720 = vadd.f32 %v1256, %v1719
    %v1721 = vpop.f32.mrb[0].mxu0
    %v1722 = vadd.f32 %v1260, %v1721
    %1723 = vmatprep.mubr.f32.mxu0 %v972
    %1724 = vmatmul.mubr.f32.gmra.mrb[0].mxu0 %v971
    %v1725 = vpop.f32.mrb[0].mxu0
    %v1726 = vadd.f32 %v1256, %v1725
    %v1727 = vpop.f32.mrb[0].mxu0
    %v1728 = vadd.f32 %v1260, %v1727
    %1729 = vmatprep.mubr.f32.mxu0 %v976
    %1730 = vmatmul.mubr.f32.gmra.mrb[0].mxu0 %v975
    %v1731 = vpop.f32.mrb[0].mxu0
    %v1732 = vadd.f32 %v1256, %v1731
    %v1733 = vpop.f32.mrb[0].mxu0
    %v1734 = vadd.f32 %v1260, %v1733
    %1735 = vmatprep.mubr.f32.mxu0 %v980
    %1736 = vmatmul.mubr.f32.gmra.mrb[0].mxu0 %v979
    %v1737 = vpop.f32.mrb[0].mxu0
    %v1738 = vadd.f32 %v1256, %v1737
    %v1739 = vpop.f32.mrb[0].mxu0
    %v1740 = vadd.f32 %v1260, %v1739
    %1741 = vmatprep.mubr.f32.mxu0 %v984
    %1742 = vmatmul.mubr.f32.gmra.mrb[0].mxu0 %v983
    %v1743 = vpop.f32.mrb[0].mxu0
    %v1744 = vadd.f32 %v1256, %v1743
    %v1745 = vpop.f32.mrb[0].mxu0
    %v1746 = vadd.f32 %v1260, %v1745
    %1747 = vdwg.mxu0
    %1748 = vmatprep.subr.mxu0 %v1118
    %1749 = vmatpush1.msra.mxu0 %v1117
    %1750 = vmatprep.subr.mxu0 %v1122
    %1751 = vmatpush1.msra.mxu0 %v1121
    %1752 = vmatprep.subr.mxu0 %v1126
    %1753 = vmatpush1.msra.mxu0 %v1125
    %1754 = vmatprep.subr.mxu0 %v1130
    %1755 = vmatpush1.msra.mxu0 %v1129
    %1756 = vmatprep.subr.mxu0 %v1134
    %1757 = vmatpush1.msra.mxu0 %v1133
    %1758 = vmatprep.subr.mxu0 %v1138
    %1759 = vmatpush1.msra.mxu0 %v1137
    %1760 = vmatprep.subr.mxu0 %v1142
    %1761 = vmatpush1.msra.mxu0 %v1141
    %1762 = vmatprep.subr.mxu0 %v1146
    %1763 = vmatpush1.msra.mxu0 %v1145
    %1764 = vmatprep.subr.mxu0 %v1150
    %1765 = vmatpush1.msra.mxu0 %v1149
    %1766 = vmatprep.subr.mxu0 %v1154
    %1767 = vmatpush1.msra.mxu0 %v1153
    %1768 = vmatprep.subr.mxu0 %v1158
    %1769 = vmatpush1.msra.mxu0 %v1157
    %1770 = vmatprep.subr.mxu0 %v1162
    %1771 = vmatpush1.msra.mxu0 %v1161
    %1772 = vmatprep.subr.mxu0 %v1166
    %1773 = vmatpush1.msra.mxu0 %v1165
    %1774 = vmatprep.subr.mxu0 %v1170
    %1775 = vmatpush1.msra.mxu0 %v1169
    %1776 = vmatprep.subr.mxu0 %v1174
    %1777 = vmatpush1.msra.mxu0 %v1173
    %1778 = vmatprep.subr.mxu0 %v1178
    %1779 = vmatpush1.msra.mxu0 %v1177
    %1780 = vmatprep.subr.mxu0 %v1182
    %1781 = vmatpush1.msra.mxu0 %v1181
    %1782 = vmatprep.subr.mxu0 %v1186
    %1783 = vmatpush1.msra.mxu0 %v1185
    %1784 = vmatprep.subr.mxu0 %v1190
    %1785 = vmatpush1.msra.mxu0 %v1189
    %1786 = vmatprep.subr.mxu0 %v1194
    %1787 = vmatpush1.msra.mxu0 %v1193
    %1788 = vmatprep.subr.mxu0 %v1198
    %1789 = vmatpush1.msra.mxu0 %v1197
    %1790 = vmatprep.subr.mxu0 %v1202
    %1791 = vmatpush1.msra.mxu0 %v1201
    %1792 = vmatprep.subr.mxu0 %v1206
    %1793 = vmatpush1.msra.mxu0 %v1205
    %1794 = vmatprep.subr.mxu0 %v1210
    %1795 = vmatpush1.msra.mxu0 %v1209
    %1796 = vmatprep.subr.mxu0 %v1214
    %1797 = vmatpush1.msra.mxu0 %v1213
    %1798 = vmatprep.subr.mxu0 %v1218
    %1799 = vmatpush1.msra.mxu0 %v1217
    %1800 = vmatprep.subr.mxu0 %v1222
    %1801 = vmatpush1.msra.mxu0 %v1221
    %1802 = vmatprep.subr.mxu0 %v1226
    %1803 = vmatpush1.msra.mxu0 %v1225
    %1804 = vmatprep.subr.mxu0 %v1230
    %1805 = vmatpush1.msra.mxu0 %v1229
    %1806 = vmatprep.subr.mxu0 %v1234
    %1807 = vmatpush1.msra.mxu0 %v1233
    %1808 = vmatprep.subr.mxu0 %v1238
    %1809 = vmatpush1.msra.mxu0 %v1237
    %1810 = vmatprep.subr.mxu0 %v1242
    %1811 = vmatpush1.msra.mxu0 %v1241
    %1812 = vmatprep.mubr.f32.mxu0 %v926
    %1813 = vmatmul.mubr.f32.gmra.mrb[0].mxu0 %v925
    %v1814 = vpop.f32.mrb[0].mxu0
    %v1815 = vadd.f32 %v1654, %v1814
    %v1816 = vpop.f32.mrb[0].mxu0
    %v1817 = vadd.f32 %v1656, %v1816
    %1818 = vmatprep.mubr.f32.mxu0 %v930
    %1819 = vmatmul.mubr.f32.gmra.mrb[0].mxu0 %v929
    %v1820 = vpop.f32.mrb[0].mxu0
    %v1821 = vadd.f32 %v1660, %v1820
    %v1822 = vpop.f32.mrb[0].mxu0
    %v1823 = vadd.f32 %v1662, %v1822
    %1824 = vmatprep.mubr.f32.mxu0 %v934
    %1825 = vmatmul.mubr.f32.gmra.mrb[0].mxu0 %v933
    %v1826 = vpop.f32.mrb[0].mxu0
    %v1827 = vadd.f32 %v1666, %v1826
    %v1828 = vpop.f32.mrb[0].mxu0
    %v1829 = vadd.f32 %v1668, %v1828
    %1830 = vmatprep.mubr.f32.mxu0 %v938
    %1831 = vmatmul.mubr.f32.gmra.mrb[0].mxu0 %v937
    %v1832 = vpop.f32.mrb[0].mxu0
    %v1833 = vadd.f32 %v1672, %v1832
    %v1834 = vpop.f32.mrb[0].mxu0
    %v1835 = vadd.f32 %v1674, %v1834
    %1836 = vmatprep.mubr.f32.mxu0 %v942
    %1837 = vmatmul.mubr.f32.gmra.mrb[0].mxu0 %v941
    %v1838 = vpop.f32.mrb[0].mxu0
    %v1839 = vadd.f32 %v1678, %v1838
    %v1840 = vpop.f32.mrb[0].mxu0
    %v1841 = vadd.f32 %v1680, %v1840
    %1842 = vmatprep.mubr.f32.mxu0 %v946
    %1843 = vmatmul.mubr.f32.gmra.mrb[0].mxu0 %v945
    %v1844 = vpop.f32.mrb[0].mxu0
    %v1845 = vadd.f32 %v1684, %v1844
    %v1846 = vpop.f32.mrb[0].mxu0
    %v1847 = vadd.f32 %v1686, %v1846
    %1848 = vmatprep.mubr.f32.mxu0 %v950
    %1849 = vmatmul.mubr.f32.gmra.mrb[0].mxu0 %v949
    %v1850 = vpop.f32.mrb[0].mxu0
    %v1851 = vadd.f32 %v1690, %v1850
    %v1852 = vpop.f32.mrb[0].mxu0
    %v1853 = vadd.f32 %v1692, %v1852
    %1854 = vmatprep.mubr.f32.mxu0 %v954
    %1855 = vmatmul.mubr.f32.gmra.mrb[0].mxu0 %v953
    %v1856 = vpop.f32.mrb[0].mxu0
    %v1857 = vadd.f32 %v1696, %v1856
    %v1858 = vpop.f32.mrb[0].mxu0
    %v1859 = vadd.f32 %v1698, %v1858
    %1860 = vmatprep.mubr.f32.mxu0 %v958
    %1861 = vmatmul.mubr.f32.gmra.mrb[0].mxu0 %v957
    %v1862 = vpop.f32.mrb[0].mxu0
    %v1863 = vadd.f32 %v1702, %v1862
    %v1864 = vpop.f32.mrb[0].mxu0
    %v1865 = vadd.f32 %v1704, %v1864
    %1866 = vmatprep.mubr.f32.mxu0 %v962
    %1867 = vmatmul.mubr.f32.gmra.mrb[0].mxu0 %v961
    %v1868 = vpop.f32.mrb[0].mxu0
    %v1869 = vadd.f32 %v1708, %v1868
    %v1870 = vpop.f32.mrb[0].mxu0
    %v1871 = vadd.f32 %v1710, %v1870
    %1872 = vmatprep.mubr.f32.mxu0 %v966
    %1873 = vmatmul.mubr.f32.gmra.mrb[0].mxu0 %v965
    %v1874 = vpop.f32.mrb[0].mxu0
    %v1875 = vadd.f32 %v1714, %v1874
    %v1876 = vpop.f32.mrb[0].mxu0
    %v1877 = vadd.f32 %v1716, %v1876
    %1878 = vmatprep.mubr.f32.mxu0 %v970
    %1879 = vmatmul.mubr.f32.gmra.mrb[0].mxu0 %v969
    %v1880 = vpop.f32.mrb[0].mxu0
    %v1881 = vadd.f32 %v1720, %v1880
    %v1882 = vpop.f32.mrb[0].mxu0
    %v1883 = vadd.f32 %v1722, %v1882
    %1884 = vmatprep.mubr.f32.mxu0 %v974
    %1885 = vmatmul.mubr.f32.gmra.mrb[0].mxu0 %v973
    %v1886 = vpop.f32.mrb[0].mxu0
    %v1887 = vadd.f32 %v1726, %v1886
    %v1888 = vpop.f32.mrb[0].mxu0
    %v1889 = vadd.f32 %v1728, %v1888
    %1890 = vmatprep.mubr.f32.mxu0 %v978
    %1891 = vmatmul.mubr.f32.gmra.mrb[0].mxu0 %v977
    %v1892 = vpop.f32.mrb[0].mxu0
    %v1893 = vadd.f32 %v1732, %v1892
    %v1894 = vpop.f32.mrb[0].mxu0
    %v1895 = vadd.f32 %v1734, %v1894
    %1896 = vmatprep.mubr.f32.mxu0 %v982
    %1897 = vmatmul.mubr.f32.gmra.mrb[0].mxu0 %v981
    %v1898 = vpop.f32.mrb[0].mxu0
    %v1899 = vadd.f32 %v1738, %v1898
    %v1900 = vpop.f32.mrb[0].mxu0
    %v1901 = vadd.f32 %v1740, %v1900
    %1902 = vmatprep.mubr.f32.mxu0 %v986
    %1903 = vmatmul.mubr.f32.gmra.mrb[0].mxu0 %v985
    %v1904 = vpop.f32.mrb[0].mxu0
    %v1905 = vadd.f32 %v1744, %v1904
    %v1906 = vpop.f32.mrb[0].mxu0
    %v1907 = vadd.f32 %v1746, %v1906
    %1908 = vdwg.mxu0
    %v1909 = vmax.f32 %v1493, 0.0
    %v1910 = vmax.f32 %v1495, 0.0
    %v1911 = vmax.f32 %v1815, 0.0
    %v1912 = vmax.f32 %v1817, 0.0
    %v1913 = vmax.f32 %v1499, 0.0
    %v1914 = vmax.f32 %v1501, 0.0
    %v1915 = vmax.f32 %v1821, 0.0
    %v1916 = vmax.f32 %v1823, 0.0
    %v1917 = vmax.f32 %v1505, 0.0
    %v1918 = vmax.f32 %v1507, 0.0
    %v1919 = vmax.f32 %v1827, 0.0
    %v1920 = vmax.f32 %v1829, 0.0
    %v1921 = vmax.f32 %v1511, 0.0
    %v1922 = vmax.f32 %v1513, 0.0
    %v1923 = vmax.f32 %v1833, 0.0
    %v1924 = vmax.f32 %v1835, 0.0
    %v1925 = vmax.f32 %v1517, 0.0
    %v1926 = vmax.f32 %v1519, 0.0
    %v1927 = vmax.f32 %v1839, 0.0
    %v1928 = vmax.f32 %v1841, 0.0
    %v1929 = vmax.f32 %v1523, 0.0
    %v1930 = vmax.f32 %v1525, 0.0
    %v1931 = vmax.f32 %v1845, 0.0
    %v1932 = vmax.f32 %v1847, 0.0
    %v1933 = vmax.f32 %v1529, 0.0
    %v1934 = vmax.f32 %v1531, 0.0
    %v1935 = vmax.f32 %v1851, 0.0
    %v1936 = vmax.f32 %v1853, 0.0
    %v1937 = vmax.f32 %v1535, 0.0
    %v1938 = vmax.f32 %v1537, 0.0
    %v1939 = vmax.f32 %v1857, 0.0
    %v1940 = vmax.f32 %v1859, 0.0
    %v1941 = vmax.f32 %v1541, 0.0
    %v1942 = vmax.f32 %v1543, 0.0
    %v1943 = vmax.f32 %v1863, 0.0
    %v1944 = vmax.f32 %v1865, 0.0
    %v1945 = vmax.f32 %v1547, 0.0
    %v1946 = vmax.f32 %v1549, 0.0
    %v1947 = vmax.f32 %v1869, 0.0
    %v1948 = vmax.f32 %v1871, 0.0
    %v1949 = vmax.f32 %v1553, 0.0
    %v1950 = vmax.f32 %v1555, 0.0
    %v1951 = vmax.f32 %v1875, 0.0
    %v1952 = vmax.f32 %v1877, 0.0
    %v1953 = vmax.f32 %v1559, 0.0
    %v1954 = vmax.f32 %v1561, 0.0
    %v1955 = vmax.f32 %v1881, 0.0
    %v1956 = vmax.f32 %v1883, 0.0
    %v1957 = vmax.f32 %v1565, 0.0
    %v1958 = vmax.f32 %v1567, 0.0
    %v1959 = vmax.f32 %v1887, 0.0
    %v1960 = vmax.f32 %v1889, 0.0
    %v1961 = vmax.f32 %v1571, 0.0
    %v1962 = vmax.f32 %v1573, 0.0
    %v1963 = vmax.f32 %v1893, 0.0
    %v1964 = vmax.f32 %v1895, 0.0
    %v1965 = vmax.f32 %v1577, 0.0
    %v1966 = vmax.f32 %v1579, 0.0
    %v1967 = vmax.f32 %v1899, 0.0
    %v1968 = vmax.f32 %v1901, 0.0
    %v1969 = vmax.f32 %v1583, 0.0
    %v1970 = vmax.f32 %v1585, 0.0
    %v1971 = vmax.f32 %v1905, 0.0
    %v1972 = vmax.f32 %v1907, 0.0
    %v1973 = vld [vmem:[%s7] sm:$0xff]
    %v1974 = vld [vmem:[%s8] sm:$0x3]
    %1976 = vset.pattern.permute.xlu0 0
    %1977 = vperm.xlu0 %1976, %v1974
    %v1978 = vpop.permute.xlu0 %1977
    %v1981 = vcombine.high %v1973, %v1973
    %v1983 = vunpack.c.l.s4 1983009808
    %v1984 = vunpack.c.0.s8 %v1983
    %v1985 = vlaneseq
    %v1986 = vshrl.u32 %v1985, 7
    %v1987 = vsub.s32 %v1984, %v1986
    %v1988 = vrot.slane %v1973, %v1987
    %v1990 = vunpack.c.l.s4 1983009808
    %v1991 = vunpack.c.0.s8 %v1990
    %v1992 = vlaneseq
    %v1993 = vshrl.u32 %v1992, 7
    %v1994 = vsub.s32 %v1991, %v1993
    %v1995 = vrot.slane %v1981, %v1994
    %v1996 = vcombine.high %v1988, %v1988
    %v1997 = vcombine.high %v1995, %v1995
    %2002 = vmatprep.subr.mxu0 %v1910
    %2003 = vmatpush1.xpose.msra.mxu0 %v1909
    %2004 = vmatprep.subr.mxu0 %v1914
    %2005 = vmatpush1.xpose.msra.mxu0 %v1913
    %2006 = vmatprep.subr.mxu0 %v1918
    %2007 = vmatpush1.xpose.msra.mxu0 %v1917
    %2008 = vmatprep.subr.mxu0 %v1922
    %2009 = vmatpush1.xpose.msra.mxu0 %v1921
    %2010 = vmatprep.subr.mxu0 %v1926
    %2011 = vmatpush1.xpose.msra.mxu0 %v1925
    %2012 = vmatprep.subr.mxu0 %v1930
    %2013 = vmatpush1.xpose.msra.mxu0 %v1929
    %2014 = vmatprep.subr.mxu0 %v1934
    %2015 = vmatpush1.xpose.msra.mxu0 %v1933
    %2016 = vmatprep.subr.mxu0 %v1938
    %2017 = vmatpush1.xpose.msra.mxu0 %v1937
    %2018 = vmatprep.subr.mxu0 %v1942
    %2019 = vmatpush1.xpose.msra.mxu0 %v1941
    %2020 = vmatprep.subr.mxu0 %v1946
    %2021 = vmatpush1.xpose.msra.mxu0 %v1945
    %2022 = vmatprep.subr.mxu0 %v1950
    %2023 = vmatpush1.xpose.msra.mxu0 %v1949
    %2024 = vmatprep.subr.mxu0 %v1954
    %2025 = vmatpush1.xpose.msra.mxu0 %v1953
    %2026 = vmatprep.subr.mxu0 %v1958
    %2027 = vmatpush1.xpose.msra.mxu0 %v1957
    %2028 = vmatprep.subr.mxu0 %v1962
    %2029 = vmatpush1.xpose.msra.mxu0 %v1961
    %2030 = vmatprep.subr.mxu0 %v1966
    %2031 = vmatpush1.xpose.msra.mxu0 %v1965
    %2032 = vmatprep.subr.mxu0 %v1970
    %2033 = vmatpush1.xpose.msra.mxu0 %v1969
    %2034 = vmatprep.subr.mxu0 0.0
    %2035 = vmatpush1.xpose.msra.mxu0 0.0
    %2036 = vmatprep.subr.mxu0 0.0
    %2037 = vmatpush1.xpose.msra.mxu0 0.0
    %2038 = vmatprep.subr.mxu0 0.0
    %2039 = vmatpush1.xpose.msra.mxu0 0.0
    %2040 = vmatprep.subr.mxu0 0.0
    %2041 = vmatpush1.xpose.msra.mxu0 0.0
    %2042 = vmatprep.subr.mxu0 0.0
    %2043 = vmatpush1.xpose.msra.mxu0 0.0
    %2044 = vmatprep.subr.mxu0 0.0
    %2045 = vmatpush1.xpose.msra.mxu0 0.0
    %2046 = vmatprep.subr.mxu0 0.0
    %2047 = vmatpush1.xpose.msra.mxu0 0.0
    %2048 = vmatprep.subr.mxu0 0.0
    %2049 = vmatpush1.xpose.msra.mxu0 0.0
    %2050 = vmatprep.subr.mxu0 0.0
    %2051 = vmatpush1.xpose.msra.mxu0 0.0
    %2052 = vmatprep.subr.mxu0 0.0
    %2053 = vmatpush1.xpose.msra.mxu0 0.0
    %2054 = vmatprep.subr.mxu0 0.0
    %2055 = vmatpush1.xpose.msra.mxu0 0.0
    %2056 = vmatprep.subr.mxu0 0.0
    %2057 = vmatpush1.xpose.msra.mxu0 0.0
    %2058 = vmatprep.subr.mxu0 0.0
    %2059 = vmatpush1.xpose.msra.mxu0 0.0
    %2060 = vmatprep.subr.mxu0 0.0
    %2061 = vmatpush1.xpose.msra.mxu0 0.0
    %2062 = vmatprep.subr.mxu0 0.0
    %2063 = vmatpush1.xpose.msra.mxu0 0.0
    %2064 = vmatprep.subr.mxu0 0.0
    %2065 = vmatpush1.xpose.msra.mxu0 0.0
    %2066 = vmatprep.mubr.f32.mxu0 %v1996
    %2067 = vmatmul.mubr.f32.gmra.mrb[0].mxu0 %v1988
    %v2068 = vpop.f32.mrb[0].mxu0
    %v2069 = vadd.f32 %v1978, %v2068
    %v2070 = vpop.f32.mrb[0].mxu0
    %2071 = vdwg.mxu0
    %2072 = vmatprep.subr.mxu0 %v1912
    %2073 = vmatpush1.xpose.msra.mxu0 %v1911
    %2074 = vmatprep.subr.mxu0 %v1916
    %2075 = vmatpush1.xpose.msra.mxu0 %v1915
    %2076 = vmatprep.subr.mxu0 %v1920
    %2077 = vmatpush1.xpose.msra.mxu0 %v1919
    %2078 = vmatprep.subr.mxu0 %v1924
    %2079 = vmatpush1.xpose.msra.mxu0 %v1923
    %2080 = vmatprep.subr.mxu0 %v1928
    %2081 = vmatpush1.xpose.msra.mxu0 %v1927
    %2082 = vmatprep.subr.mxu0 %v1932
    %2083 = vmatpush1.xpose.msra.mxu0 %v1931
    %2084 = vmatprep.subr.mxu0 %v1936
    %2085 = vmatpush1.xpose.msra.mxu0 %v1935
    %2086 = vmatprep.subr.mxu0 %v1940
    %2087 = vmatpush1.xpose.msra.mxu0 %v1939
    %2088 = vmatprep.subr.mxu0 %v1944
    %2089 = vmatpush1.xpose.msra.mxu0 %v1943
    %2090 = vmatprep.subr.mxu0 %v1948
    %2091 = vmatpush1.xpose.msra.mxu0 %v1947
    %2092 = vmatprep.subr.mxu0 %v1952
    %2093 = vmatpush1.xpose.msra.mxu0 %v1951
    %2094 = vmatprep.subr.mxu0 %v1956
    %2095 = vmatpush1.xpose.msra.mxu0 %v1955
    %2096 = vmatprep.subr.mxu0 %v1960
    %2097 = vmatpush1.xpose.msra.mxu0 %v1959
    %2098 = vmatprep.subr.mxu0 %v1964
    %2099 = vmatpush1.xpose.msra.mxu0 %v1963
    %2100 = vmatprep.subr.mxu0 %v1968
    %2101 = vmatpush1.xpose.msra.mxu0 %v1967
    %2102 = vmatprep.subr.mxu0 %v1972
    %2103 = vmatpush1.xpose.msra.mxu0 %v1971
    %2104 = vmatprep.subr.mxu0 0.0
    %2105 = vmatpush1.xpose.msra.mxu0 0.0
    %2106 = vmatprep.subr.mxu0 0.0
    %2107 = vmatpush1.xpose.msra.mxu0 0.0
    %2108 = vmatprep.subr.mxu0 0.0
    %2109 = vmatpush1.xpose.msra.mxu0 0.0
    %2110 = vmatprep.subr.mxu0 0.0
    %2111 = vmatpush1.xpose.msra.mxu0 0.0
    %2112 = vmatprep.subr.mxu0 0.0
    %2113 = vmatpush1.xpose.msra.mxu0 0.0
    %2114 = vmatprep.subr.mxu0 0.0
    %2115 = vmatpush1.xpose.msra.mxu0 0.0
    %2116 = vmatprep.subr.mxu0 0.0
    %2117 = vmatpush1.xpose.msra.mxu0 0.0
    %2118 = vmatprep.subr.mxu0 0.0
    %2119 = vmatpush1.xpose.msra.mxu0 0.0
    %2120 = vmatprep.subr.mxu0 0.0
    %2121 = vmatpush1.xpose.msra.mxu0 0.0
    %2122 = vmatprep.subr.mxu0 0.0
    %2123 = vmatpush1.xpose.msra.mxu0 0.0
    %2124 = vmatprep.subr.mxu0 0.0
    %2125 = vmatpush1.xpose.msra.mxu0 0.0
    %2126 = vmatprep.subr.mxu0 0.0
    %2127 = vmatpush1.xpose.msra.mxu0 0.0
    %2128 = vmatprep.subr.mxu0 0.0
    %2129 = vmatpush1.xpose.msra.mxu0 0.0
    %2130 = vmatprep.subr.mxu0 0.0
    %2131 = vmatpush1.xpose.msra.mxu0 0.0
    %2132 = vmatprep.subr.mxu0 0.0
    %2133 = vmatpush1.xpose.msra.mxu0 0.0
    %2134 = vmatprep.subr.mxu0 0.0
    %2135 = vmatpush1.xpose.msra.mxu0 0.0
    %2136 = vmatprep.mubr.f32.mxu0 %v1997
    %2137 = vmatmul.mubr.f32.gmra.mrb[0].mxu0 %v1995
    %v2138 = vpop.f32.mrb[0].mxu0
    %v2139 = vadd.f32 %v2069, %v2138
    %v2140 = vpop.f32.mrb[0].mxu0
    %2141 = vdwg.mxu0
    %2142 = vst [vmem:[#allocation5] sm:$0x3] %v2139
    // Predicated region
    $region42: #{tpu_custom_call.1} parent=1 // pred_check
      _
    $region43: #{tpu_custom_call.1} parent=1 // pred_check_branch
      %2144 = sbr.rel (0) target = $region45
    $region44: #{tpu_custom_call.1} parent=1 // pred_region
      %s2146 = ssub.s32 32, 32
      %2147 = vsyncadd [#allocation4], %s2146
      %s2149 = sshll.u32 [#allocation5], 4
      %s2150 = int_to_ptr.vmem [resolvable:$true] %s2149
      %2152 = dma.vmem_to_hbm [thread:$0]  %s2150, 32, %s9, [#allocation4]
    $region45: #{tpu_custom_call.1} parent=1 // pred_fallthru
      _
    // Predicated region
    $region46: #{tpu_custom_call.1} parent=1 // pred_check
      _
    $region47: #{tpu_custom_call.1} parent=1 // pred_check_branch
      %2154 = sbr.rel (0) target = $region49
    $region48: #{tpu_custom_call.1} parent=1 // pred_region
      %2155 = dma.done [#allocation4], 32
    $region49: #{tpu_custom_call.1} parent=1 // pred_fallthru
      _
    %2156 = vsyncpa [#allocation3], 1
    %2157 = vsyncpa [#allocation4], 1

</llo_original>
